<compile_context>
chip_gen: v7x
topology: tpu7x:2x2x1
jax: 0.10.0
libtpu: 0.0.40
codegen_flags: <defaults>
</compile_context>

<pallas_src>
import inspect

import jax
import jax.numpy as jnp
from jax.experimental import pallas as pl
from jax.experimental.pallas import tpu as pltpu


_LANE = 128
_SUBLANE = 8
_VMEM_TILE_BUDGET = 32 * 1024 * 1024      # budget used when picking tile_b
_VMEM_LIMIT_BYTES = 48 * 1024 * 1024      # explicit scoped-VMEM limit: above v5e's
                                          # 16 MiB default, below v7x's 64 MiB physical
_SINGLE_BUFFER_THRESHOLD = 2 * 1024 * 1024  # only single-buffer "big" weight sets


def _blockspec_supports_single_buffer():
    try:
        return hasattr(pl, "Buffered") and (
            "pipeline_mode" in inspect.signature(pl.BlockSpec).parameters)
    except (TypeError, ValueError):
        return False


_SUPPORTS_SINGLE_BUFFER = _blockspec_supports_single_buffer()


def _round_up(x, m):
    return ((x + m - 1) // m) * m


def _pad2(a, rows, cols):
    pr, pc = rows - a.shape[0], cols - a.shape[1]
    if pr or pc:
        a = jnp.pad(a, ((0, pr), (0, pc)))
    return a


# ---------------------------------------------------------------------------
# Fused encoder kernel (compress MLP + concatenated mu/logvar heads + std)
# ---------------------------------------------------------------------------
def _make_encoder_kernel(num_layers):
    """Refs: x, (w_i, b_i) * num_layers, w_heads, b_heads, out = [mu|logvar|std]."""

    def kernel(*refs):
        x_ref = refs[0]
        layer_refs = refs[1:1 + 2 * num_layers]
        wh_ref = refs[1 + 2 * num_layers]
        bh_ref = refs[2 + 2 * num_layers]
        out_ref = refs[3 + 2 * num_layers]

        # Compress MLP: `feature` stays in VMEM/vregs, never touches HBM.
        feat = x_ref[...]
        for i in range(num_layers):
            w = layer_refs[2 * i][...]
            b = layer_refs[2 * i + 1][...]              # (1, out) broadcasts over rows
            feat = jnp.maximum(
                jnp.dot(feat, w,
                        preferred_element_type=jnp.float32,
                        precision=jax.lax.Precision.HIGHEST) + b,
                0.0)

        # Both heads in one MXU pass over the concatenated [D_last, 2*E_pad] weights.
        heads = jnp.dot(feat, wh_ref[...],
                        preferred_element_type=jnp.float32,
                        precision=jax.lax.Precision.HIGHEST) + bh_ref[...]
        e_pad = out_ref.shape[-1] // 3                   # split point is a 128-multiple
        logvar = heads[:, e_pad:]
        std = jnp.exp(0.5 * logvar)                      # f32 EUP exp (v5e-safe)
        # Single wide lane-dense store: [mu | logvar | std].
        out_ref[...] = jnp.concatenate([heads, std], axis=-1).astype(out_ref.dtype)

    return kernel


# ---------------------------------------------------------------------------
# Tile selection (VMEM-budgeted, v7x-aware)
# ---------------------------------------------------------------------------
def _pick_tile_b(batch8, d_pad, widest_pad, out_cols, weight_bytes, max_tile_b):
    """Largest sublane-aligned batch tile that fits the VMEM budget."""

    def footprint(tile):
        io = 2 * tile * (d_pad + out_cols) * 4        # double-buffered x / out tiles
        act = 3 * tile * widest_pad * 4               # chained activations / scratch
        return io + act + 2 * weight_bytes            # weights (worst case double-buffered)

    tile = _SUBLANE
    for cand in (1024, 512, 256, 128, 64, 32, 16, 8):
        if cand > max_tile_b or cand > batch8:
            continue
        if footprint(cand) <= _VMEM_TILE_BUDGET:
            tile = cand
            break

    # v7x has two TensorCores: keep >= 2 grid steps whenever the batch allows it
    # (e.g. B~500 -> 2 x 256 instead of 1 x 512) so the "parallel" axis shards.
    if batch8 > _SUBLANE and tile >= batch8:
        tile = _round_up((batch8 + 1) // 2, _SUBLANE)
    return tile


# ---------------------------------------------------------------------------
# One-time parameter prep + jitted forward builder
# ---------------------------------------------------------------------------
def make_encoder_forward(params, *, max_tile_b=512, single_buffer_weights=None):
    """Pads/concats the weights ONCE, returns a jitted x -> (mu, std, logvar)."""
    seq = params["seq"]
    w1, b1 = params["fc1"]
    w2, b2 = params["fc2"]

    data_dim = seq[0][0].shape[0] if seq else w1.shape[0]
    embed_dim = w1.shape[1]

    dims = [data_dim] + [w.shape[1] for (w, _) in seq]
    dims_pad = [_round_up(d, _LANE) for d in dims]
    e_pad = _round_up(embed_dim, _LANE)
    out_cols = 3 * e_pad

    # --- one-time weight prep (kept OUT of the per-call path) --------------
    operands = []
    for li, (w, b) in enumerate(seq):
        operands.append(_pad2(w.astype(jnp.float32), dims_pad[li], dims_pad[li + 1]))
        operands.append(_pad2(b.astype(jnp.float32), 1, dims_pad[li + 1]))
    wh = jnp.concatenate(
        [_pad2(w1.astype(jnp.float32), dims_pad[-1], e_pad),
         _pad2(w2.astype(jnp.float32), dims_pad[-1], e_pad)], axis=1)
    bh = jnp.concatenate(
        [_pad2(b1.astype(jnp.float32), 1, e_pad),
         _pad2(b2.astype(jnp.float32), 1, e_pad)], axis=1)
    operands += [wh, bh]
    operands = [jax.device_put(o) for o in operands]

    weight_bytes = sum(int(o.size) * 4 for o in operands)
    if single_buffer_weights is None:
        # Double-buffering tiny weights is free; only opt in when the resident
        # weight set is big enough for the VMEM saving to matter.
        single_buffer_weights = weight_bytes >= _SINGLE_BUFFER_THRESHOLD
    single_buffer_weights = bool(single_buffer_weights) and _SUPPORTS_SINGLE_BUFFER

    def _resident_spec(shape):
        # Constant block index -> the block stays resident in VMEM for all tiles.
        if single_buffer_weights:
            return pl.BlockSpec(shape, lambda i: (0, 0),
                                pipeline_mode=pl.Buffered(1))
        return pl.BlockSpec(shape, lambda i: (0, 0))

    num_layers = len(seq)
    kernel = _make_encoder_kernel(num_layers)
    d_pad = dims_pad[0]
    widest_pad = max(dims_pad + [2 * e_pad])

    @jax.jit
    def _forward(x, *weight_ops):
        batch = x.shape[0]
        batch8 = _round_up(max(batch, 1), _SUBLANE)
        tile_b = _pick_tile_b(batch8, d_pad, widest_pad, out_cols,
                              weight_bytes, max_tile_b)
        b_pad = _round_up(batch8, tile_b)

        x_p = _pad2(x.astype(jnp.float32), b_pad, d_pad)

        in_specs = [pl.BlockSpec((tile_b, d_pad), lambda i: (i, 0))]
        in_specs += [_resident_spec(w.shape) for w in weight_ops]

        out = pl.pallas_call(
            kernel,
            out_shape=jax.ShapeDtypeStruct((b_pad, out_cols), jnp.float32),
            grid=(b_pad // tile_b,),
            in_specs=in_specs,
            out_specs=pl.BlockSpec((tile_b, out_cols), lambda i: (i, 0)),
            compiler_params=pltpu.CompilerParams(
                dimension_semantics=("parallel",),
                vmem_limit_bytes=_VMEM_LIMIT_BYTES),
        )(x_p, *weight_ops)

        # Strip batch / lane padding and split the fused slab.
        mu = out[:batch, :embed_dim]
        logvar = out[:batch, e_pad:e_pad + embed_dim]
        std = out[:batch, 2 * e_pad:2 * e_pad + embed_dim]
        return mu, std, logvar

    return lambda x: _forward(x, *operands)


# ---------------------------------------------------------------------------
# Parameter init (shapes implied by Encoder.__init__)
# ---------------------------------------------------------------------------
def init_encoder_params(key, data_dim, compress_dims, embedding_dim):
    params = {"seq": []}
    dim = data_dim
    for item in list(compress_dims):
        key, kw, kb = jax.random.split(key, 3)
        bound = 1.0 / jnp.sqrt(dim)
        w = jax.random.uniform(kw, (dim, item), jnp.float32, -bound, bound)
        b = jax.random.uniform(kb, (1, item), jnp.float32, -bound, bound)
        params["seq"].append((w, b))
        dim = item
    bound = 1.0 / jnp.sqrt(dim)
    key, k1w, k1b, k2w, k2b = jax.random.split(key, 5)
    params["fc1"] = (
        jax.random.uniform(k1w, (dim, embedding_dim), jnp.float32, -bound, bound),
        jax.random.uniform(k1b, (1, embedding_dim), jnp.float32, -bound, bound),
    )
    params["fc2"] = (
        jax.random.uniform(k2w, (dim, embedding_dim), jnp.float32, -bound, bound),
        jax.random.uniform(k2b, (1, embedding_dim), jnp.float32, -bound, bound),
    )
    return params


# ---------------------------------------------------------------------------
# Pure-JAX reference for correctness check
# ---------------------------------------------------------------------------
def encoder_forward_ref(params, x):
    feature = x
    for (w, b) in params["seq"]:
        feature = jnp.maximum(feature @ w + b, 0.0)
    mu = feature @ params["fc1"][0] + params["fc1"][1]
    logvar = feature @ params["fc2"][0] + params["fc2"][1]
    return mu, jnp.exp(0.5 * logvar), logvar


if __name__ == "__main__":
    key = jax.random.PRNGKey(0)

    # Small shapes consistent with the module.
    batch, data_dim = 8, 32
    compress_dims = (32, 32)
    embedding_dim = 16

    key, kp, kx = jax.random.split(key, 3)
    params = init_encoder_params(kp, data_dim, compress_dims, embedding_dim)
    x = jax.random.normal(kx, (batch, data_dim), jnp.float32)

    encoder_forward = make_encoder_forward(params)
    mu, std, logvar = encoder_forward(x)
    jax.block_until_ready((mu, std, logvar))

    mu_r, std_r, logvar_r = encoder_forward_ref(params, x)
    assert mu.shape == (batch, embedding_dim)
    assert std.shape == (batch, embedding_dim)
    assert logvar.shape == (batch, embedding_dim)
    assert jnp.allclose(mu, mu_r, atol=1e-5, rtol=1e-5)
    assert jnp.allclose(std, std_r, atol=1e-5, rtol=1e-5)
    assert jnp.allclose(logvar, logvar_r, atol=1e-5, rtol=1e-5)

    print("KERNEL_OK")
</pallas_src>

<mosaic_0001>
module attributes {stable_mosaic.version = 11 : i64} {
  func.func @kernel(%arg0: i32, %arg1: memref<8x128xf32, #tpu.memory_space<vmem>>, %arg2: memref<128x128xf32, #tpu.memory_space<vmem>>, %arg3: memref<1x128xf32, #tpu.memory_space<vmem>>, %arg4: memref<128x128xf32, #tpu.memory_space<vmem>>, %arg5: memref<1x128xf32, #tpu.memory_space<vmem>>, %arg6: memref<128x256xf32, #tpu.memory_space<vmem>>, %arg7: memref<1x256xf32, #tpu.memory_space<vmem>>, %arg8: memref<8x384xf32, #tpu.memory_space<vmem>>) attributes {dimension_semantics = [#tpu.dimension_semantics<parallel>], iteration_bounds = array<i64: 1>, scalar_prefetch = 0 : i64, scratch_operands = 0 : i64, tpu.core_type = #tpu.core_type<tc>, window_params = [{transform_indices = @transform_0, window_bounds = array<i64: 8, 128>}, {pipeline_mode = #tpu.pipeline_mode<synchronous>, transform_indices = @transform_1, window_bounds = array<i64: 128, 128>}, {pipeline_mode = #tpu.pipeline_mode<synchronous>, transform_indices = @transform_2, window_bounds = array<i64: 1, 128>}, {pipeline_mode = #tpu.pipeline_mode<synchronous>, transform_indices = @transform_3, window_bounds = array<i64: 128, 128>}, {pipeline_mode = #tpu.pipeline_mode<synchronous>, transform_indices = @transform_4, window_bounds = array<i64: 1, 128>}, {pipeline_mode = #tpu.pipeline_mode<synchronous>, transform_indices = @transform_5, window_bounds = array<i64: 128, 256>}, {pipeline_mode = #tpu.pipeline_mode<synchronous>, transform_indices = @transform_6, window_bounds = array<i64: 1, 256>}, {transform_indices = @transform_7, window_bounds = array<i64: 8, 384>}]} {
    %c0 = arith.constant 0 : index
    %c0_0 = arith.constant 0 : index
    %0 = vector.load %arg1[%c0, %c0_0] : memref<8x128xf32, #tpu.memory_space<vmem>>, vector<8x128xf32>
    %c0_1 = arith.constant 0 : index
    %c0_2 = arith.constant 0 : index
    %1 = vector.load %arg2[%c0_1, %c0_2] : memref<128x128xf32, #tpu.memory_space<vmem>>, vector<128x128xf32>
    %c0_3 = arith.constant 0 : index
    %c0_4 = arith.constant 0 : index
    %2 = vector.load %arg3[%c0_3, %c0_4] : memref<1x128xf32, #tpu.memory_space<vmem>>, vector<1x128xf32>
    %cst = arith.constant dense<0.000000e+00> : vector<8x128xf32>
    %3 = tpu.matmul %0, %1, %cst {dimension_numbers = #tpu.dot_dimension_numbers<[1], [0], [0], [1], [0, 0, 1, 1], [], []>, precision = #tpu.contract_precision<fp32>} : vector<8x128xf32>, vector<128x128xf32>, vector<8x128xf32> -> vector<8x128xf32>
    %4 = vector.broadcast %2 : vector<1x128xf32> to vector<8x128xf32>
    %5 = arith.addf %3, %4 : vector<8x128xf32>
    %cst_5 = arith.constant 0.000000e+00 : f32
    %6 = vector.broadcast %cst_5 : f32 to vector<8x128xf32>
    %7 = arith.maximumf %5, %6 : vector<8x128xf32>
    %c0_6 = arith.constant 0 : index
    %c0_7 = arith.constant 0 : index
    %8 = vector.load %arg4[%c0_6, %c0_7] : memref<128x128xf32, #tpu.memory_space<vmem>>, vector<128x128xf32>
    %c0_8 = arith.constant 0 : index
    %c0_9 = arith.constant 0 : index
    %9 = vector.load %arg5[%c0_8, %c0_9] : memref<1x128xf32, #tpu.memory_space<vmem>>, vector<1x128xf32>
    %cst_10 = arith.constant dense<0.000000e+00> : vector<8x128xf32>
    %10 = tpu.matmul %7, %8, %cst_10 {dimension_numbers = #tpu.dot_dimension_numbers<[1], [0], [0], [1], [0, 0, 1, 1], [], []>, precision = #tpu.contract_precision<fp32>} : vector<8x128xf32>, vector<128x128xf32>, vector<8x128xf32> -> vector<8x128xf32>
    %11 = vector.broadcast %9 : vector<1x128xf32> to vector<8x128xf32>
    %12 = arith.addf %10, %11 : vector<8x128xf32>
    %cst_11 = arith.constant 0.000000e+00 : f32
    %13 = vector.broadcast %cst_11 : f32 to vector<8x128xf32>
    %14 = arith.maximumf %12, %13 : vector<8x128xf32>
    %c0_12 = arith.constant 0 : index
    %c0_13 = arith.constant 0 : index
    %15 = vector.load %arg6[%c0_12, %c0_13] : memref<128x256xf32, #tpu.memory_space<vmem>>, vector<128x256xf32>
    %cst_14 = arith.constant dense<0.000000e+00> : vector<8x256xf32>
    %16 = tpu.matmul %14, %15, %cst_14 {dimension_numbers = #tpu.dot_dimension_numbers<[1], [0], [0], [1], [0, 0, 1, 1], [], []>, precision = #tpu.contract_precision<fp32>} : vector<8x128xf32>, vector<128x256xf32>, vector<8x256xf32> -> vector<8x256xf32>
    %c0_15 = arith.constant 0 : index
    %c0_16 = arith.constant 0 : index
    %17 = vector.load %arg7[%c0_15, %c0_16] : memref<1x256xf32, #tpu.memory_space<vmem>>, vector<1x256xf32>
    %18 = vector.broadcast %17 : vector<1x256xf32> to vector<8x256xf32>
    %19 = arith.addf %16, %18 : vector<8x256xf32>
    %20 = vector.extract_strided_slice %19 {offsets = [0, 128], sizes = [8, 128], strides = [1, 1]} : vector<8x256xf32> to vector<8x128xf32>
    %cst_17 = arith.constant 5.000000e-01 : f32
    %21 = vector.broadcast %cst_17 : f32 to vector<8x128xf32>
    %22 = arith.mulf %21, %20 : vector<8x128xf32>
    %23 = math.exp %22 : vector<8x128xf32>
    %24 = tpu.concatenate %19, %23 in 1 : vector<8x256xf32>, vector<8x128xf32> -> vector<8x384xf32>
    %c0_18 = arith.constant 0 : index
    %c0_19 = arith.constant 0 : index
    %25 = vector.load %arg8[%c0_18, %c0_19] : memref<8x384xf32, #tpu.memory_space<vmem>>, vector<8x384xf32>
    tpu.vector_store %arg8[%c0_18, %c0_19], %24 {strides = array<i32>} : memref<8x384xf32, #tpu.memory_space<vmem>>, vector<8x384xf32>,
    return
  }
  func.func @transform_0(%arg0: i32) -> (i32, i32) {
    %c0_i32 = arith.constant 0 : i32
    %c0_i32_0 = arith.constant 0 : i32
    return %arg0, %c0_i32 : i32, i32
  }
  func.func @transform_1(%arg0: i32) -> (i32, i32) {
    %c0_i32 = arith.constant 0 : i32
    %c0_i32_0 = arith.constant 0 : i32
    %c0_i32_1 = arith.constant 0 : i32
    return %c0_i32, %c0_i32_0 : i32, i32
  }
  func.func @transform_2(%arg0: i32) -> (i32, i32) {
    %c0_i32 = arith.constant 0 : i32
    %c0_i32_0 = arith.constant 0 : i32
    %c0_i32_1 = arith.constant 0 : i32
    return %c0_i32, %c0_i32_0 : i32, i32
  }
  func.func @transform_3(%arg0: i32) -> (i32, i32) {
    %c0_i32 = arith.constant 0 : i32
    %c0_i32_0 = arith.constant 0 : i32
    %c0_i32_1 = arith.constant 0 : i32
    return %c0_i32, %c0_i32_0 : i32, i32
  }
  func.func @transform_4(%arg0: i32) -> (i32, i32) {
    %c0_i32 = arith.constant 0 : i32
    %c0_i32_0 = arith.constant 0 : i32
    %c0_i32_1 = arith.constant 0 : i32
    return %c0_i32, %c0_i32_0 : i32, i32
  }
  func.func @transform_5(%arg0: i32) -> (i32, i32) {
    %c0_i32 = arith.constant 0 : i32
    %c0_i32_0 = arith.constant 0 : i32
    %c0_i32_1 = arith.constant 0 : i32
    return %c0_i32, %c0_i32_0 : i32, i32
  }
  func.func @transform_6(%arg0: i32) -> (i32, i32) {
    %c0_i32 = arith.constant 0 : i32
    %c0_i32_0 = arith.constant 0 : i32
    %c0_i32_1 = arith.constant 0 : i32
    return %c0_i32, %c0_i32_0 : i32, i32
  }
  func.func @transform_7(%arg0: i32) -> (i32, i32) {
    %c0_i32 = arith.constant 0 : i32
    %c0_i32_0 = arith.constant 0 : i32
    return %arg0, %c0_i32 : i32, i32
  }
}

</mosaic_0001>

<llo_original>
// kernel: _forward.1
$region0: #{_forward.1}
  #allocation0 [shape = 'u32[]', space=smem, size = 0x4, offset = 0x4, fixed_abs, tag = 'smem constant byte address 0x4 - core index']
  #allocation1 [shape = 'u32[144,128]{1,0:T(1,128)}', space=vmem, size = 0x12000, scoped, tag = 'internal scratch']
  %s0 = inlined_call_operand.vmem [shape: f32[8,128], index: 0, kind: input, shape index: {}]
  %s1 = inlined_call_operand.hbm [shape: f32[128,128], index: 1, kind: input, shape index: {}]
  %s2 = inlined_call_operand.vmem [shape: f32[1,128], index: 2, kind: input, shape index: {}]
  %s3 = inlined_call_operand.hbm [shape: f32[128,128], index: 3, kind: input, shape index: {}]
  %s4 = inlined_call_operand.vmem [shape: f32[1,128], index: 4, kind: input, shape index: {}]
  %s5 = inlined_call_operand.hbm [shape: f32[128,256], index: 5, kind: input, shape index: {}]
  %s6 = inlined_call_operand.vmem [shape: f32[1,256], index: 6, kind: input, shape index: {}]
  %s7 = inlined_call_operand.vmem [shape: f32[8,384], index: 7, kind: output, shape index: {}]
  %s8 = sld [smem:[#allocation0]]
  $region50: #{_forward.1} parent=0
    _
  %s10 = ssub.s32 1, %s8
  %s11 = scalar_select 0, %s10, %s8
  $region1: #{_forward.1} parent=0
    #allocation2 [shape = 'u8[65536]{0}', space=vmem, size = 0x10000, scoped, tag = 'input window, operand 1, single buffered']
    #allocation3 [shape = 's32[1]{0}', space=sflag, size = 0x4, scoped, tag = 'scoped memory for _forward.1']
    #allocation4 [shape = 'u8[65536]{0}', space=vmem, size = 0x10000, scoped, tag = 'input window, operand 3, single buffered']
    #allocation5 [shape = 's32[1]{0}', space=sflag, size = 0x4, scoped, tag = 'scoped memory for _forward.1']
    #allocation6 [shape = 'u8[131072]{0}', space=vmem, size = 0x20000, scoped, tag = 'input window, operand 5, single buffered']
    %12 = vsyncpa [#allocation3], 0
    %13 = vsyncpa [#allocation5], 0
    // Predicated region
    $region2: #{_forward.1} parent=1 // pred_check
      _
    $region3: #{_forward.1} parent=1 // pred_check_branch
      %15 = sbr.rel (0) target = $region5
    $region4: #{_forward.1} parent=1 // pred_region
      _
    $region5: #{_forward.1} parent=1 // pred_fallthru
      _
    // Predicated region
    $region6: #{_forward.1} parent=1 // pred_check
      _
    $region7: #{_forward.1} parent=1 // pred_check_branch
      %17 = sbr.rel (0) target = $region9
    $region8: #{_forward.1} parent=1 // pred_region
      %s19 = ssub.s32 2048, 2048
      %20 = vsyncadd [#allocation3], %s19
      %s21 = sshll.u32 [#allocation2], 4
      %s22 = int_to_ptr.vmem [resolvable:$true] %s21
      %27 = dma.hbm_to_vmem [thread:$0]  %s1, 2048, %s22, [#allocation3], 128, 128, 8
    $region9: #{_forward.1} parent=1 // pred_fallthru
      _
    // Predicated region
    $region10: #{_forward.1} parent=1 // pred_check
      _
    $region11: #{_forward.1} parent=1 // pred_check_branch
      %29 = sbr.rel (0) target = $region13
    $region12: #{_forward.1} parent=1 // pred_region
      _
    $region13: #{_forward.1} parent=1 // pred_fallthru
      _
    // Predicated region
    $region14: #{_forward.1} parent=1 // pred_check
      _
    $region15: #{_forward.1} parent=1 // pred_check_branch
      %31 = sbr.rel (0) target = $region17
    $region16: #{_forward.1} parent=1 // pred_region
      %s33 = ssub.s32 2048, 2048
      %34 = vsyncadd [#allocation5], %s33
      %s35 = sshll.u32 [#allocation4], 4
      %s36 = int_to_ptr.vmem [resolvable:$true] %s35
      %41 = dma.hbm_to_vmem [thread:$0]  %s3, 2048, %s36, [#allocation5], 128, 128, 8
    $region17: #{_forward.1} parent=1 // pred_fallthru
      _
    // Predicated region
    $region18: #{_forward.1} parent=1 // pred_check
      _
    $region19: #{_forward.1} parent=1 // pred_check_branch
      %43 = sbr.rel (0) target = $region21
    $region20: #{_forward.1} parent=1 // pred_region
      _
    $region21: #{_forward.1} parent=1 // pred_fallthru
      _
    // Predicated region
    $region22: #{_forward.1} parent=1 // pred_check
      _
    $region23: #{_forward.1} parent=1 // pred_check_branch
      %45 = sbr.rel (0) target = $region25
    $region24: #{_forward.1} parent=1 // pred_region
      %s47 = ssub.s32 4096, 4096
      %48 = vsyncadd [#allocation5], %s47
      %s49 = sshll.u32 [#allocation6], 4
      %s50 = int_to_ptr.vmem [resolvable:$true] %s49
      %55 = dma.hbm_to_vmem [thread:$0]  %s5, 4096, %s50, [#allocation5], 256, 256, 16
    $region25: #{_forward.1} parent=1 // pred_fallthru
      _
    // Predicated region
    $region26: #{_forward.1} parent=1 // pred_check
      _
    $region27: #{_forward.1} parent=1 // pred_check_branch
      %57 = sbr.rel (0) target = $region29
    $region28: #{_forward.1} parent=1 // pred_region
      _
    $region29: #{_forward.1} parent=1 // pred_fallthru
      _
    // Predicated region
    $region30: #{_forward.1} parent=1 // pred_check
      _
    $region31: #{_forward.1} parent=1 // pred_check_branch
      %59 = sbr.rel (0) target = $region33
    $region32: #{_forward.1} parent=1 // pred_region
      %60 = dma.done [#allocation3], 2048
    $region33: #{_forward.1} parent=1 // pred_fallthru
      _
    // Predicated region
    $region34: #{_forward.1} parent=1 // pred_check
      _
    $region35: #{_forward.1} parent=1 // pred_check_branch
      %62 = sbr.rel (0) target = $region37
    $region36: #{_forward.1} parent=1 // pred_region
      %63 = dma.done [#allocation5], 2048
    $region37: #{_forward.1} parent=1 // pred_fallthru
      _
    // Predicated region
    $region38: #{_forward.1} parent=1 // pred_check
      _
    $region39: #{_forward.1} parent=1 // pred_check_branch
      %65 = sbr.rel (0) target = $region41
    $region40: #{_forward.1} parent=1 // pred_region
      %66 = dma.done [#allocation5], 4096
    $region41: #{_forward.1} parent=1 // pred_fallthru
      _
    %v67 = vld [vmem:[%s0] sm:$0xff]
    %v68 = vld [vmem:[#allocation2] sm:$0xff]
    %v69 = vld [vmem:[#allocation2 + $0x8] sm:$0xff]
    %v70 = vld [vmem:[#allocation2 + $0x10] sm:$0xff]
    %v71 = vld [vmem:[#allocation2 + $0x18] sm:$0xff]
    %v72 = vld [vmem:[#allocation2 + $0x20] sm:$0xff]
    %v73 = vld [vmem:[#allocation2 + $0x28] sm:$0xff]
    %v74 = vld [vmem:[#allocation2 + $0x30] sm:$0xff]
    %v75 = vld [vmem:[#allocation2 + $0x38] sm:$0xff]
    %v76 = vld [vmem:[#allocation2 + $0x40] sm:$0xff]
    %v77 = vld [vmem:[#allocation2 + $0x48] sm:$0xff]
    %v78 = vld [vmem:[#allocation2 + $0x50] sm:$0xff]
    %v79 = vld [vmem:[#allocation2 + $0x58] sm:$0xff]
    %v80 = vld [vmem:[#allocation2 + $0x60] sm:$0xff]
    %v81 = vld [vmem:[#allocation2 + $0x68] sm:$0xff]
    %v82 = vld [vmem:[#allocation2 + $0x70] sm:$0xff]
    %v83 = vld [vmem:[#allocation2 + $0x78] sm:$0xff]
    %v84 = vld [vmem:[%s2] sm:$0x1]
    %v86 = vlaneseq
    %v87 = vshrl.u32 %v86, 7
    %v88 = vsub.s32 0, %v87
    %v89 = vrot.slane %v84, %v88
    %91 = vmatprep.subr.mxu0 0.0
    %v92 = vand.u32 %v68, 4294901760
    %93 = vmatpush1.msra.mxu0 %v92
    %94 = vmatprep.subr.mxu0 0.0
    %v95 = vand.u32 %v69, 4294901760
    %96 = vmatpush1.msra.mxu0 %v95
    %97 = vmatprep.subr.mxu0 0.0
    %v98 = vand.u32 %v70, 4294901760
    %99 = vmatpush1.msra.mxu0 %v98
    %100 = vmatprep.subr.mxu0 0.0
    %v101 = vand.u32 %v71, 4294901760
    %102 = vmatpush1.msra.mxu0 %v101
    %103 = vmatprep.subr.mxu0 0.0
    %v104 = vand.u32 %v72, 4294901760
    %105 = vmatpush1.msra.mxu0 %v104
    %106 = vmatprep.subr.mxu0 0.0
    %v107 = vand.u32 %v73, 4294901760
    %108 = vmatpush1.msra.mxu0 %v107
    %109 = vmatprep.subr.mxu0 0.0
    %v110 = vand.u32 %v74, 4294901760
    %111 = vmatpush1.msra.mxu0 %v110
    %112 = vmatprep.subr.mxu0 0.0
    %v113 = vand.u32 %v75, 4294901760
    %114 = vmatpush1.msra.mxu0 %v113
    %115 = vmatprep.subr.mxu0 0.0
    %v116 = vand.u32 %v76, 4294901760
    %117 = vmatpush1.msra.mxu0 %v116
    %118 = vmatprep.subr.mxu0 0.0
    %v119 = vand.u32 %v77, 4294901760
    %120 = vmatpush1.msra.mxu0 %v119
    %121 = vmatprep.subr.mxu0 0.0
    %v122 = vand.u32 %v78, 4294901760
    %123 = vmatpush1.msra.mxu0 %v122
    %124 = vmatprep.subr.mxu0 0.0
    %v125 = vand.u32 %v79, 4294901760
    %126 = vmatpush1.msra.mxu0 %v125
    %127 = vmatprep.subr.mxu0 0.0
    %v128 = vand.u32 %v80, 4294901760
    %129 = vmatpush1.msra.mxu0 %v128
    %130 = vmatprep.subr.mxu0 0.0
    %v131 = vand.u32 %v81, 4294901760
    %132 = vmatpush1.msra.mxu0 %v131
    %133 = vmatprep.subr.mxu0 0.0
    %v134 = vand.u32 %v82, 4294901760
    %135 = vmatpush1.msra.mxu0 %v134
    %136 = vmatprep.subr.mxu0 0.0
    %v137 = vand.u32 %v83, 4294901760
    %138 = vmatpush1.msra.mxu0 %v137
    %139 = vmatprep.subr.mxu0 0.0
    %140 = vmatpush1.msra.mxu0 0.0
    %141 = vmatprep.subr.mxu0 0.0
    %142 = vmatpush1.msra.mxu0 0.0
    %143 = vmatprep.subr.mxu0 0.0
    %144 = vmatpush1.msra.mxu0 0.0
    %145 = vmatprep.subr.mxu0 0.0
    %146 = vmatpush1.msra.mxu0 0.0
    %147 = vmatprep.subr.mxu0 0.0
    %148 = vmatpush1.msra.mxu0 0.0
    %149 = vmatprep.subr.mxu0 0.0
    %150 = vmatpush1.msra.mxu0 0.0
    %151 = vmatprep.subr.mxu0 0.0
    %152 = vmatpush1.msra.mxu0 0.0
    %153 = vmatprep.subr.mxu0 0.0
    %154 = vmatpush1.msra.mxu0 0.0
    %155 = vmatprep.subr.mxu0 0.0
    %156 = vmatpush1.msra.mxu0 0.0
    %157 = vmatprep.subr.mxu0 0.0
    %158 = vmatpush1.msra.mxu0 0.0
    %159 = vmatprep.subr.mxu0 0.0
    %160 = vmatpush1.msra.mxu0 0.0
    %161 = vmatprep.subr.mxu0 0.0
    %162 = vmatpush1.msra.mxu0 0.0
    %163 = vmatprep.subr.mxu0 0.0
    %164 = vmatpush1.msra.mxu0 0.0
    %165 = vmatprep.subr.mxu0 0.0
    %166 = vmatpush1.msra.mxu0 0.0
    %167 = vmatprep.subr.mxu0 0.0
    %168 = vmatpush1.msra.mxu0 0.0
    %169 = vmatprep.subr.mxu0 0.0
    %170 = vmatpush1.msra.mxu0 0.0
    %171 = vmatprep.mubr.f32.mxu0 0.0
    %v172 = vand.u32 %v67, 4294901760
    %v173 = vsub.f32 %v67, %v172
    %v174 = vand.u32 %v173, 4294901760
    %v175 = vsub.f32 %v173, %v174
    %v176 = vand.u32 %v175, 4294901760
    %177 = vmatmul.mubr.f32.gmra.mrb[0].mxu0 %v176
    %v178 = vpop.f32.mrb[0].mxu0
    %v179 = vadd.f32 %v89, %v178
    %v180 = vpop.f32.mrb[0].mxu0
    %181 = vdwg.mxu0
    %182 = vmatprep.subr.mxu0 0.0
    %v183 = vand.u32 %v68, 4294901760
    %v184 = vsub.f32 %v68, %v183
    %v185 = vand.u32 %v184, 4294901760
    %v186 = vsub.f32 %v184, %v185
    %v187 = vand.u32 %v186, 4294901760
    %188 = vmatpush1.msra.mxu0 %v187
    %189 = vmatprep.subr.mxu0 0.0
    %v190 = vand.u32 %v69, 4294901760
    %v191 = vsub.f32 %v69, %v190
    %v192 = vand.u32 %v191, 4294901760
    %v193 = vsub.f32 %v191, %v192
    %v194 = vand.u32 %v193, 4294901760
    %195 = vmatpush1.msra.mxu0 %v194
    %196 = vmatprep.subr.mxu0 0.0
    %v197 = vand.u32 %v70, 4294901760
    %v198 = vsub.f32 %v70, %v197
    %v199 = vand.u32 %v198, 4294901760
    %v200 = vsub.f32 %v198, %v199
    %v201 = vand.u32 %v200, 4294901760
    %202 = vmatpush1.msra.mxu0 %v201
    %203 = vmatprep.subr.mxu0 0.0
    %v204 = vand.u32 %v71, 4294901760
    %v205 = vsub.f32 %v71, %v204
    %v206 = vand.u32 %v205, 4294901760
    %v207 = vsub.f32 %v205, %v206
    %v208 = vand.u32 %v207, 4294901760
    %209 = vmatpush1.msra.mxu0 %v208
    %210 = vmatprep.subr.mxu0 0.0
    %v211 = vand.u32 %v72, 4294901760
    %v212 = vsub.f32 %v72, %v211
    %v213 = vand.u32 %v212, 4294901760
    %v214 = vsub.f32 %v212, %v213
    %v215 = vand.u32 %v214, 4294901760
    %216 = vmatpush1.msra.mxu0 %v215
    %217 = vmatprep.subr.mxu0 0.0
    %v218 = vand.u32 %v73, 4294901760
    %v219 = vsub.f32 %v73, %v218
    %v220 = vand.u32 %v219, 4294901760
    %v221 = vsub.f32 %v219, %v220
    %v222 = vand.u32 %v221, 4294901760
    %223 = vmatpush1.msra.mxu0 %v222
    %224 = vmatprep.subr.mxu0 0.0
    %v225 = vand.u32 %v74, 4294901760
    %v226 = vsub.f32 %v74, %v225
    %v227 = vand.u32 %v226, 4294901760
    %v228 = vsub.f32 %v226, %v227
    %v229 = vand.u32 %v228, 4294901760
    %230 = vmatpush1.msra.mxu0 %v229
    %231 = vmatprep.subr.mxu0 0.0
    %v232 = vand.u32 %v75, 4294901760
    %v233 = vsub.f32 %v75, %v232
    %v234 = vand.u32 %v233, 4294901760
    %v235 = vsub.f32 %v233, %v234
    %v236 = vand.u32 %v235, 4294901760
    %237 = vmatpush1.msra.mxu0 %v236
    %238 = vmatprep.subr.mxu0 0.0
    %v239 = vand.u32 %v76, 4294901760
    %v240 = vsub.f32 %v76, %v239
    %v241 = vand.u32 %v240, 4294901760
    %v242 = vsub.f32 %v240, %v241
    %v243 = vand.u32 %v242, 4294901760
    %244 = vmatpush1.msra.mxu0 %v243
    %245 = vmatprep.subr.mxu0 0.0
    %v246 = vand.u32 %v77, 4294901760
    %v247 = vsub.f32 %v77, %v246
    %v248 = vand.u32 %v247, 4294901760
    %v249 = vsub.f32 %v247, %v248
    %v250 = vand.u32 %v249, 4294901760
    %251 = vmatpush1.msra.mxu0 %v250
    %252 = vmatprep.subr.mxu0 0.0
    %v253 = vand.u32 %v78, 4294901760
    %v254 = vsub.f32 %v78, %v253
    %v255 = vand.u32 %v254, 4294901760
    %v256 = vsub.f32 %v254, %v255
    %v257 = vand.u32 %v256, 4294901760
    %258 = vmatpush1.msra.mxu0 %v257
    %259 = vmatprep.subr.mxu0 0.0
    %v260 = vand.u32 %v79, 4294901760
    %v261 = vsub.f32 %v79, %v260
    %v262 = vand.u32 %v261, 4294901760
    %v263 = vsub.f32 %v261, %v262
    %v264 = vand.u32 %v263, 4294901760
    %265 = vmatpush1.msra.mxu0 %v264
    %266 = vmatprep.subr.mxu0 0.0
    %v267 = vand.u32 %v80, 4294901760
    %v268 = vsub.f32 %v80, %v267
    %v269 = vand.u32 %v268, 4294901760
    %v270 = vsub.f32 %v268, %v269
    %v271 = vand.u32 %v270, 4294901760
    %272 = vmatpush1.msra.mxu0 %v271
    %273 = vmatprep.subr.mxu0 0.0
    %v274 = vand.u32 %v81, 4294901760
    %v275 = vsub.f32 %v81, %v274
    %v276 = vand.u32 %v275, 4294901760
    %v277 = vsub.f32 %v275, %v276
    %v278 = vand.u32 %v277, 4294901760
    %279 = vmatpush1.msra.mxu0 %v278
    %280 = vmatprep.subr.mxu0 0.0
    %v281 = vand.u32 %v82, 4294901760
    %v282 = vsub.f32 %v82, %v281
    %v283 = vand.u32 %v282, 4294901760
    %v284 = vsub.f32 %v282, %v283
    %v285 = vand.u32 %v284, 4294901760
    %286 = vmatpush1.msra.mxu0 %v285
    %287 = vmatprep.subr.mxu0 0.0
    %v288 = vand.u32 %v83, 4294901760
    %v289 = vsub.f32 %v83, %v288
    %v290 = vand.u32 %v289, 4294901760
    %v291 = vsub.f32 %v289, %v290
    %v292 = vand.u32 %v291, 4294901760
    %293 = vmatpush1.msra.mxu0 %v292
    %294 = vmatprep.subr.mxu0 0.0
    %295 = vmatpush1.msra.mxu0 0.0
    %296 = vmatprep.subr.mxu0 0.0
    %297 = vmatpush1.msra.mxu0 0.0
    %298 = vmatprep.subr.mxu0 0.0
    %299 = vmatpush1.msra.mxu0 0.0
    %300 = vmatprep.subr.mxu0 0.0
    %301 = vmatpush1.msra.mxu0 0.0
    %302 = vmatprep.subr.mxu0 0.0
    %303 = vmatpush1.msra.mxu0 0.0
    %304 = vmatprep.subr.mxu0 0.0
    %305 = vmatpush1.msra.mxu0 0.0
    %306 = vmatprep.subr.mxu0 0.0
    %307 = vmatpush1.msra.mxu0 0.0
    %308 = vmatprep.subr.mxu0 0.0
    %309 = vmatpush1.msra.mxu0 0.0
    %310 = vmatprep.subr.mxu0 0.0
    %311 = vmatpush1.msra.mxu0 0.0
    %312 = vmatprep.subr.mxu0 0.0
    %313 = vmatpush1.msra.mxu0 0.0
    %314 = vmatprep.subr.mxu0 0.0
    %315 = vmatpush1.msra.mxu0 0.0
    %316 = vmatprep.subr.mxu0 0.0
    %317 = vmatpush1.msra.mxu0 0.0
    %318 = vmatprep.subr.mxu0 0.0
    %319 = vmatpush1.msra.mxu0 0.0
    %320 = vmatprep.subr.mxu0 0.0
    %321 = vmatpush1.msra.mxu0 0.0
    %322 = vmatprep.subr.mxu0 0.0
    %323 = vmatpush1.msra.mxu0 0.0
    %324 = vmatprep.subr.mxu0 0.0
    %325 = vmatpush1.msra.mxu0 0.0
    %326 = vmatprep.mubr.f32.mxu0 0.0
    %v327 = vand.u32 %v67, 4294901760
    %328 = vmatmul.mubr.f32.gmra.mrb[0].mxu0 %v327
    %v329 = vpop.f32.mrb[0].mxu0
    %v330 = vadd.f32 %v179, %v329
    %v331 = vpop.f32.mrb[0].mxu0
    %332 = vdwg.mxu0
    %333 = vmatprep.subr.mxu0 0.0
    %v334 = vand.u32 %v68, 4294901760
    %v335 = vsub.f32 %v68, %v334
    %336 = vmatpush1.msra.mxu0 %v335
    %337 = vmatprep.subr.mxu0 0.0
    %v338 = vand.u32 %v69, 4294901760
    %v339 = vsub.f32 %v69, %v338
    %340 = vmatpush1.msra.mxu0 %v339
    %341 = vmatprep.subr.mxu0 0.0
    %v342 = vand.u32 %v70, 4294901760
    %v343 = vsub.f32 %v70, %v342
    %344 = vmatpush1.msra.mxu0 %v343
    %345 = vmatprep.subr.mxu0 0.0
    %v346 = vand.u32 %v71, 4294901760
    %v347 = vsub.f32 %v71, %v346
    %348 = vmatpush1.msra.mxu0 %v347
    %349 = vmatprep.subr.mxu0 0.0
    %v350 = vand.u32 %v72, 4294901760
    %v351 = vsub.f32 %v72, %v350
    %352 = vmatpush1.msra.mxu0 %v351
    %353 = vmatprep.subr.mxu0 0.0
    %v354 = vand.u32 %v73, 4294901760
    %v355 = vsub.f32 %v73, %v354
    %356 = vmatpush1.msra.mxu0 %v355
    %357 = vmatprep.subr.mxu0 0.0
    %v358 = vand.u32 %v74, 4294901760
    %v359 = vsub.f32 %v74, %v358
    %360 = vmatpush1.msra.mxu0 %v359
    %361 = vmatprep.subr.mxu0 0.0
    %v362 = vand.u32 %v75, 4294901760
    %v363 = vsub.f32 %v75, %v362
    %364 = vmatpush1.msra.mxu0 %v363
    %365 = vmatprep.subr.mxu0 0.0
    %v366 = vand.u32 %v76, 4294901760
    %v367 = vsub.f32 %v76, %v366
    %368 = vmatpush1.msra.mxu0 %v367
    %369 = vmatprep.subr.mxu0 0.0
    %v370 = vand.u32 %v77, 4294901760
    %v371 = vsub.f32 %v77, %v370
    %372 = vmatpush1.msra.mxu0 %v371
    %373 = vmatprep.subr.mxu0 0.0
    %v374 = vand.u32 %v78, 4294901760
    %v375 = vsub.f32 %v78, %v374
    %376 = vmatpush1.msra.mxu0 %v375
    %377 = vmatprep.subr.mxu0 0.0
    %v378 = vand.u32 %v79, 4294901760
    %v379 = vsub.f32 %v79, %v378
    %380 = vmatpush1.msra.mxu0 %v379
    %381 = vmatprep.subr.mxu0 0.0
    %v382 = vand.u32 %v80, 4294901760
    %v383 = vsub.f32 %v80, %v382
    %384 = vmatpush1.msra.mxu0 %v383
    %385 = vmatprep.subr.mxu0 0.0
    %v386 = vand.u32 %v81, 4294901760
    %v387 = vsub.f32 %v81, %v386
    %388 = vmatpush1.msra.mxu0 %v387
    %389 = vmatprep.subr.mxu0 0.0
    %v390 = vand.u32 %v82, 4294901760
    %v391 = vsub.f32 %v82, %v390
    %392 = vmatpush1.msra.mxu0 %v391
    %393 = vmatprep.subr.mxu0 0.0
    %v394 = vand.u32 %v83, 4294901760
    %v395 = vsub.f32 %v83, %v394
    %396 = vmatpush1.msra.mxu0 %v395
    %397 = vmatprep.subr.mxu0 0.0
    %398 = vmatpush1.msra.mxu0 0.0
    %399 = vmatprep.subr.mxu0 0.0
    %400 = vmatpush1.msra.mxu0 0.0
    %401 = vmatprep.subr.mxu0 0.0
    %402 = vmatpush1.msra.mxu0 0.0
    %403 = vmatprep.subr.mxu0 0.0
    %404 = vmatpush1.msra.mxu0 0.0
    %405 = vmatprep.subr.mxu0 0.0
    %406 = vmatpush1.msra.mxu0 0.0
    %407 = vmatprep.subr.mxu0 0.0
    %408 = vmatpush1.msra.mxu0 0.0
    %409 = vmatprep.subr.mxu0 0.0
    %410 = vmatpush1.msra.mxu0 0.0
    %411 = vmatprep.subr.mxu0 0.0
    %412 = vmatpush1.msra.mxu0 0.0
    %413 = vmatprep.subr.mxu0 0.0
    %414 = vmatpush1.msra.mxu0 0.0
    %415 = vmatprep.subr.mxu0 0.0
    %416 = vmatpush1.msra.mxu0 0.0
    %417 = vmatprep.subr.mxu0 0.0
    %418 = vmatpush1.msra.mxu0 0.0
    %419 = vmatprep.subr.mxu0 0.0
    %420 = vmatpush1.msra.mxu0 0.0
    %421 = vmatprep.subr.mxu0 0.0
    %422 = vmatpush1.msra.mxu0 0.0
    %423 = vmatprep.subr.mxu0 0.0
    %424 = vmatpush1.msra.mxu0 0.0
    %425 = vmatprep.subr.mxu0 0.0
    %426 = vmatpush1.msra.mxu0 0.0
    %427 = vmatprep.subr.mxu0 0.0
    %428 = vmatpush1.msra.mxu0 0.0
    %429 = vmatprep.mubr.f32.mxu0 0.0
    %v430 = vand.u32 %v67, 4294901760
    %v431 = vsub.f32 %v67, %v430
    %432 = vmatmul.mubr.f32.gmra.mrb[0].mxu0 %v431
    %v433 = vpop.f32.mrb[0].mxu0
    %v434 = vadd.f32 %v330, %v433
    %v435 = vpop.f32.mrb[0].mxu0
    %436 = vdwg.mxu0
    %437 = vmatprep.subr.mxu0 0.0
    %v438 = vand.u32 %v68, 4294901760
    %439 = vmatpush1.msra.mxu0 %v438
    %440 = vmatprep.subr.mxu0 0.0
    %v441 = vand.u32 %v69, 4294901760
    %442 = vmatpush1.msra.mxu0 %v441
    %443 = vmatprep.subr.mxu0 0.0
    %v444 = vand.u32 %v70, 4294901760
    %445 = vmatpush1.msra.mxu0 %v444
    %446 = vmatprep.subr.mxu0 0.0
    %v447 = vand.u32 %v71, 4294901760
    %448 = vmatpush1.msra.mxu0 %v447
    %449 = vmatprep.subr.mxu0 0.0
    %v450 = vand.u32 %v72, 4294901760
    %451 = vmatpush1.msra.mxu0 %v450
    %452 = vmatprep.subr.mxu0 0.0
    %v453 = vand.u32 %v73, 4294901760
    %454 = vmatpush1.msra.mxu0 %v453
    %455 = vmatprep.subr.mxu0 0.0
    %v456 = vand.u32 %v74, 4294901760
    %457 = vmatpush1.msra.mxu0 %v456
    %458 = vmatprep.subr.mxu0 0.0
    %v459 = vand.u32 %v75, 4294901760
    %460 = vmatpush1.msra.mxu0 %v459
    %461 = vmatprep.subr.mxu0 0.0
    %v462 = vand.u32 %v76, 4294901760
    %463 = vmatpush1.msra.mxu0 %v462
    %464 = vmatprep.subr.mxu0 0.0
    %v465 = vand.u32 %v77, 4294901760
    %466 = vmatpush1.msra.mxu0 %v465
    %467 = vmatprep.subr.mxu0 0.0
    %v468 = vand.u32 %v78, 4294901760
    %469 = vmatpush1.msra.mxu0 %v468
    %470 = vmatprep.subr.mxu0 0.0
    %v471 = vand.u32 %v79, 4294901760
    %472 = vmatpush1.msra.mxu0 %v471
    %473 = vmatprep.subr.mxu0 0.0
    %v474 = vand.u32 %v80, 4294901760
    %475 = vmatpush1.msra.mxu0 %v474
    %476 = vmatprep.subr.mxu0 0.0
    %v477 = vand.u32 %v81, 4294901760
    %478 = vmatpush1.msra.mxu0 %v477
    %479 = vmatprep.subr.mxu0 0.0
    %v480 = vand.u32 %v82, 4294901760
    %481 = vmatpush1.msra.mxu0 %v480
    %482 = vmatprep.subr.mxu0 0.0
    %v483 = vand.u32 %v83, 4294901760
    %484 = vmatpush1.msra.mxu0 %v483
    %485 = vmatprep.subr.mxu0 0.0
    %486 = vmatpush1.msra.mxu0 0.0
    %487 = vmatprep.subr.mxu0 0.0
    %488 = vmatpush1.msra.mxu0 0.0
    %489 = vmatprep.subr.mxu0 0.0
    %490 = vmatpush1.msra.mxu0 0.0
    %491 = vmatprep.subr.mxu0 0.0
    %492 = vmatpush1.msra.mxu0 0.0
    %493 = vmatprep.subr.mxu0 0.0
    %494 = vmatpush1.msra.mxu0 0.0
    %495 = vmatprep.subr.mxu0 0.0
    %496 = vmatpush1.msra.mxu0 0.0
    %497 = vmatprep.subr.mxu0 0.0
    %498 = vmatpush1.msra.mxu0 0.0
    %499 = vmatprep.subr.mxu0 0.0
    %500 = vmatpush1.msra.mxu0 0.0
    %501 = vmatprep.subr.mxu0 0.0
    %502 = vmatpush1.msra.mxu0 0.0
    %503 = vmatprep.subr.mxu0 0.0
    %504 = vmatpush1.msra.mxu0 0.0
    %505 = vmatprep.subr.mxu0 0.0
    %506 = vmatpush1.msra.mxu0 0.0
    %507 = vmatprep.subr.mxu0 0.0
    %508 = vmatpush1.msra.mxu0 0.0
    %509 = vmatprep.subr.mxu0 0.0
    %510 = vmatpush1.msra.mxu0 0.0
    %511 = vmatprep.subr.mxu0 0.0
    %512 = vmatpush1.msra.mxu0 0.0
    %513 = vmatprep.subr.mxu0 0.0
    %514 = vmatpush1.msra.mxu0 0.0
    %515 = vmatprep.subr.mxu0 0.0
    %516 = vmatpush1.msra.mxu0 0.0
    %517 = vmatprep.mubr.f32.mxu0 0.0
    %v518 = vand.u32 %v67, 4294901760
    %v519 = vsub.f32 %v67, %v518
    %v520 = vand.u32 %v519, 4294901760
    %521 = vmatmul.mubr.f32.gmra.mrb[0].mxu0 %v520
    %v522 = vpop.f32.mrb[0].mxu0
    %v523 = vadd.f32 %v434, %v522
    %v524 = vpop.f32.mrb[0].mxu0
    %525 = vdwg.mxu0
    %526 = vmatprep.subr.mxu0 0.0
    %v527 = vand.u32 %v68, 4294901760
    %v528 = vsub.f32 %v68, %v527
    %v529 = vand.u32 %v528, 4294901760
    %530 = vmatpush1.msra.mxu0 %v529
    %531 = vmatprep.subr.mxu0 0.0
    %v532 = vand.u32 %v69, 4294901760
    %v533 = vsub.f32 %v69, %v532
    %v534 = vand.u32 %v533, 4294901760
    %535 = vmatpush1.msra.mxu0 %v534
    %536 = vmatprep.subr.mxu0 0.0
    %v537 = vand.u32 %v70, 4294901760
    %v538 = vsub.f32 %v70, %v537
    %v539 = vand.u32 %v538, 4294901760
    %540 = vmatpush1.msra.mxu0 %v539
    %541 = vmatprep.subr.mxu0 0.0
    %v542 = vand.u32 %v71, 4294901760
    %v543 = vsub.f32 %v71, %v542
    %v544 = vand.u32 %v543, 4294901760
    %545 = vmatpush1.msra.mxu0 %v544
    %546 = vmatprep.subr.mxu0 0.0
    %v547 = vand.u32 %v72, 4294901760
    %v548 = vsub.f32 %v72, %v547
    %v549 = vand.u32 %v548, 4294901760
    %550 = vmatpush1.msra.mxu0 %v549
    %551 = vmatprep.subr.mxu0 0.0
    %v552 = vand.u32 %v73, 4294901760
    %v553 = vsub.f32 %v73, %v552
    %v554 = vand.u32 %v553, 4294901760
    %555 = vmatpush1.msra.mxu0 %v554
    %556 = vmatprep.subr.mxu0 0.0
    %v557 = vand.u32 %v74, 4294901760
    %v558 = vsub.f32 %v74, %v557
    %v559 = vand.u32 %v558, 4294901760
    %560 = vmatpush1.msra.mxu0 %v559
    %561 = vmatprep.subr.mxu0 0.0
    %v562 = vand.u32 %v75, 4294901760
    %v563 = vsub.f32 %v75, %v562
    %v564 = vand.u32 %v563, 4294901760
    %565 = vmatpush1.msra.mxu0 %v564
    %566 = vmatprep.subr.mxu0 0.0
    %v567 = vand.u32 %v76, 4294901760
    %v568 = vsub.f32 %v76, %v567
    %v569 = vand.u32 %v568, 4294901760
    %570 = vmatpush1.msra.mxu0 %v569
    %571 = vmatprep.subr.mxu0 0.0
    %v572 = vand.u32 %v77, 4294901760
    %v573 = vsub.f32 %v77, %v572
    %v574 = vand.u32 %v573, 4294901760
    %575 = vmatpush1.msra.mxu0 %v574
    %576 = vmatprep.subr.mxu0 0.0
    %v577 = vand.u32 %v78, 4294901760
    %v578 = vsub.f32 %v78, %v577
    %v579 = vand.u32 %v578, 4294901760
    %580 = vmatpush1.msra.mxu0 %v579
    %581 = vmatprep.subr.mxu0 0.0
    %v582 = vand.u32 %v79, 4294901760
    %v583 = vsub.f32 %v79, %v582
    %v584 = vand.u32 %v583, 4294901760
    %585 = vmatpush1.msra.mxu0 %v584
    %586 = vmatprep.subr.mxu0 0.0
    %v587 = vand.u32 %v80, 4294901760
    %v588 = vsub.f32 %v80, %v587
    %v589 = vand.u32 %v588, 4294901760
    %590 = vmatpush1.msra.mxu0 %v589
    %591 = vmatprep.subr.mxu0 0.0
    %v592 = vand.u32 %v81, 4294901760
    %v593 = vsub.f32 %v81, %v592
    %v594 = vand.u32 %v593, 4294901760
    %595 = vmatpush1.msra.mxu0 %v594
    %596 = vmatprep.subr.mxu0 0.0
    %v597 = vand.u32 %v82, 4294901760
    %v598 = vsub.f32 %v82, %v597
    %v599 = vand.u32 %v598, 4294901760
    %600 = vmatpush1.msra.mxu0 %v599
    %601 = vmatprep.subr.mxu0 0.0
    %v602 = vand.u32 %v83, 4294901760
    %v603 = vsub.f32 %v83, %v602
    %v604 = vand.u32 %v603, 4294901760
    %605 = vmatpush1.msra.mxu0 %v604
    %606 = vmatprep.subr.mxu0 0.0
    %607 = vmatpush1.msra.mxu0 0.0
    %608 = vmatprep.subr.mxu0 0.0
    %609 = vmatpush1.msra.mxu0 0.0
    %610 = vmatprep.subr.mxu0 0.0
    %611 = vmatpush1.msra.mxu0 0.0
    %612 = vmatprep.subr.mxu0 0.0
    %613 = vmatpush1.msra.mxu0 0.0
    %614 = vmatprep.subr.mxu0 0.0
    %615 = vmatpush1.msra.mxu0 0.0
    %616 = vmatprep.subr.mxu0 0.0
    %617 = vmatpush1.msra.mxu0 0.0
    %618 = vmatprep.subr.mxu0 0.0
    %619 = vmatpush1.msra.mxu0 0.0
    %620 = vmatprep.subr.mxu0 0.0
    %621 = vmatpush1.msra.mxu0 0.0
    %622 = vmatprep.subr.mxu0 0.0
    %623 = vmatpush1.msra.mxu0 0.0
    %624 = vmatprep.subr.mxu0 0.0
    %625 = vmatpush1.msra.mxu0 0.0
    %626 = vmatprep.subr.mxu0 0.0
    %627 = vmatpush1.msra.mxu0 0.0
    %628 = vmatprep.subr.mxu0 0.0
    %629 = vmatpush1.msra.mxu0 0.0
    %630 = vmatprep.subr.mxu0 0.0
    %631 = vmatpush1.msra.mxu0 0.0
    %632 = vmatprep.subr.mxu0 0.0
    %633 = vmatpush1.msra.mxu0 0.0
    %634 = vmatprep.subr.mxu0 0.0
    %635 = vmatpush1.msra.mxu0 0.0
    %636 = vmatprep.subr.mxu0 0.0
    %637 = vmatpush1.msra.mxu0 0.0
    %638 = vmatprep.mubr.f32.mxu0 0.0
    %v639 = vand.u32 %v67, 4294901760
    %640 = vmatmul.mubr.f32.gmra.mrb[0].mxu0 %v639
    %v641 = vpop.f32.mrb[0].mxu0
    %v642 = vadd.f32 %v523, %v641
    %v643 = vpop.f32.mrb[0].mxu0
    %644 = vdwg.mxu0
    %645 = vmatprep.subr.mxu0 0.0
    %v646 = vand.u32 %v68, 4294901760
    %647 = vmatpush1.msra.mxu0 %v646
    %648 = vmatprep.subr.mxu0 0.0
    %v649 = vand.u32 %v69, 4294901760
    %650 = vmatpush1.msra.mxu0 %v649
    %651 = vmatprep.subr.mxu0 0.0
    %v652 = vand.u32 %v70, 4294901760
    %653 = vmatpush1.msra.mxu0 %v652
    %654 = vmatprep.subr.mxu0 0.0
    %v655 = vand.u32 %v71, 4294901760
    %656 = vmatpush1.msra.mxu0 %v655
    %657 = vmatprep.subr.mxu0 0.0
    %v658 = vand.u32 %v72, 4294901760
    %659 = vmatpush1.msra.mxu0 %v658
    %660 = vmatprep.subr.mxu0 0.0
    %v661 = vand.u32 %v73, 4294901760
    %662 = vmatpush1.msra.mxu0 %v661
    %663 = vmatprep.subr.mxu0 0.0
    %v664 = vand.u32 %v74, 4294901760
    %665 = vmatpush1.msra.mxu0 %v664
    %666 = vmatprep.subr.mxu0 0.0
    %v667 = vand.u32 %v75, 4294901760
    %668 = vmatpush1.msra.mxu0 %v667
    %669 = vmatprep.subr.mxu0 0.0
    %v670 = vand.u32 %v76, 4294901760
    %671 = vmatpush1.msra.mxu0 %v670
    %672 = vmatprep.subr.mxu0 0.0
    %v673 = vand.u32 %v77, 4294901760
    %674 = vmatpush1.msra.mxu0 %v673
    %675 = vmatprep.subr.mxu0 0.0
    %v676 = vand.u32 %v78, 4294901760
    %677 = vmatpush1.msra.mxu0 %v676
    %678 = vmatprep.subr.mxu0 0.0
    %v679 = vand.u32 %v79, 4294901760
    %680 = vmatpush1.msra.mxu0 %v679
    %681 = vmatprep.subr.mxu0 0.0
    %v682 = vand.u32 %v80, 4294901760
    %683 = vmatpush1.msra.mxu0 %v682
    %684 = vmatprep.subr.mxu0 0.0
    %v685 = vand.u32 %v81, 4294901760
    %686 = vmatpush1.msra.mxu0 %v685
    %687 = vmatprep.subr.mxu0 0.0
    %v688 = vand.u32 %v82, 4294901760
    %689 = vmatpush1.msra.mxu0 %v688
    %690 = vmatprep.subr.mxu0 0.0
    %v691 = vand.u32 %v83, 4294901760
    %692 = vmatpush1.msra.mxu0 %v691
    %693 = vmatprep.subr.mxu0 0.0
    %694 = vmatpush1.msra.mxu0 0.0
    %695 = vmatprep.subr.mxu0 0.0
    %696 = vmatpush1.msra.mxu0 0.0
    %697 = vmatprep.subr.mxu0 0.0
    %698 = vmatpush1.msra.mxu0 0.0
    %699 = vmatprep.subr.mxu0 0.0
    %700 = vmatpush1.msra.mxu0 0.0
    %701 = vmatprep.subr.mxu0 0.0
    %702 = vmatpush1.msra.mxu0 0.0
    %703 = vmatprep.subr.mxu0 0.0
    %704 = vmatpush1.msra.mxu0 0.0
    %705 = vmatprep.subr.mxu0 0.0
    %706 = vmatpush1.msra.mxu0 0.0
    %707 = vmatprep.subr.mxu0 0.0
    %708 = vmatpush1.msra.mxu0 0.0
    %709 = vmatprep.subr.mxu0 0.0
    %710 = vmatpush1.msra.mxu0 0.0
    %711 = vmatprep.subr.mxu0 0.0
    %712 = vmatpush1.msra.mxu0 0.0
    %713 = vmatprep.subr.mxu0 0.0
    %714 = vmatpush1.msra.mxu0 0.0
    %715 = vmatprep.subr.mxu0 0.0
    %716 = vmatpush1.msra.mxu0 0.0
    %717 = vmatprep.subr.mxu0 0.0
    %718 = vmatpush1.msra.mxu0 0.0
    %719 = vmatprep.subr.mxu0 0.0
    %720 = vmatpush1.msra.mxu0 0.0
    %721 = vmatprep.subr.mxu0 0.0
    %722 = vmatpush1.msra.mxu0 0.0
    %723 = vmatprep.subr.mxu0 0.0
    %724 = vmatpush1.msra.mxu0 0.0
    %725 = vmatprep.mubr.f32.mxu0 0.0
    %v726 = vand.u32 %v67, 4294901760
    %727 = vmatmul.mubr.f32.gmra.mrb[0].mxu0 %v726
    %v728 = vpop.f32.mrb[0].mxu0
    %v729 = vadd.f32 %v642, %v728
    %v730 = vpop.f32.mrb[0].mxu0
    %731 = vdwg.mxu0
    %v732 = vmax.f32 %v729, 0.0
    %v733 = vld [vmem:[#allocation4] sm:$0xff]
    %v734 = vld [vmem:[#allocation4 + $0x8] sm:$0xff]
    %v735 = vld [vmem:[#allocation4 + $0x10] sm:$0xff]
    %v736 = vld [vmem:[#allocation4 + $0x18] sm:$0xff]
    %v737 = vld [vmem:[#allocation4 + $0x20] sm:$0xff]
    %v738 = vld [vmem:[#allocation4 + $0x28] sm:$0xff]
    %v739 = vld [vmem:[#allocation4 + $0x30] sm:$0xff]
    %v740 = vld [vmem:[#allocation4 + $0x38] sm:$0xff]
    %v741 = vld [vmem:[#allocation4 + $0x40] sm:$0xff]
    %v742 = vld [vmem:[#allocation4 + $0x48] sm:$0xff]
    %v743 = vld [vmem:[#allocation4 + $0x50] sm:$0xff]
    %v744 = vld [vmem:[#allocation4 + $0x58] sm:$0xff]
    %v745 = vld [vmem:[#allocation4 + $0x60] sm:$0xff]
    %v746 = vld [vmem:[#allocation4 + $0x68] sm:$0xff]
    %v747 = vld [vmem:[#allocation4 + $0x70] sm:$0xff]
    %v748 = vld [vmem:[#allocation4 + $0x78] sm:$0xff]
    %v749 = vld [vmem:[%s4] sm:$0x1]
    %v751 = vlaneseq
    %v752 = vshrl.u32 %v751, 7
    %v753 = vsub.s32 0, %v752
    %v754 = vrot.slane %v749, %v753
    %756 = vmatprep.subr.mxu0 0.0
    %v757 = vand.u32 %v733, 4294901760
    %758 = vmatpush1.msra.mxu0 %v757
    %759 = vmatprep.subr.mxu0 0.0
    %v760 = vand.u32 %v734, 4294901760
    %761 = vmatpush1.msra.mxu0 %v760
    %762 = vmatprep.subr.mxu0 0.0
    %v763 = vand.u32 %v735, 4294901760
    %764 = vmatpush1.msra.mxu0 %v763
    %765 = vmatprep.subr.mxu0 0.0
    %v766 = vand.u32 %v736, 4294901760
    %767 = vmatpush1.msra.mxu0 %v766
    %768 = vmatprep.subr.mxu0 0.0
    %v769 = vand.u32 %v737, 4294901760
    %770 = vmatpush1.msra.mxu0 %v769
    %771 = vmatprep.subr.mxu0 0.0
    %v772 = vand.u32 %v738, 4294901760
    %773 = vmatpush1.msra.mxu0 %v772
    %774 = vmatprep.subr.mxu0 0.0
    %v775 = vand.u32 %v739, 4294901760
    %776 = vmatpush1.msra.mxu0 %v775
    %777 = vmatprep.subr.mxu0 0.0
    %v778 = vand.u32 %v740, 4294901760
    %779 = vmatpush1.msra.mxu0 %v778
    %780 = vmatprep.subr.mxu0 0.0
    %v781 = vand.u32 %v741, 4294901760
    %782 = vmatpush1.msra.mxu0 %v781
    %783 = vmatprep.subr.mxu0 0.0
    %v784 = vand.u32 %v742, 4294901760
    %785 = vmatpush1.msra.mxu0 %v784
    %786 = vmatprep.subr.mxu0 0.0
    %v787 = vand.u32 %v743, 4294901760
    %788 = vmatpush1.msra.mxu0 %v787
    %789 = vmatprep.subr.mxu0 0.0
    %v790 = vand.u32 %v744, 4294901760
    %791 = vmatpush1.msra.mxu0 %v790
    %792 = vmatprep.subr.mxu0 0.0
    %v793 = vand.u32 %v745, 4294901760
    %794 = vmatpush1.msra.mxu0 %v793
    %795 = vmatprep.subr.mxu0 0.0
    %v796 = vand.u32 %v746, 4294901760
    %797 = vmatpush1.msra.mxu0 %v796
    %798 = vmatprep.subr.mxu0 0.0
    %v799 = vand.u32 %v747, 4294901760
    %800 = vmatpush1.msra.mxu0 %v799
    %801 = vmatprep.subr.mxu0 0.0
    %v802 = vand.u32 %v748, 4294901760
    %803 = vmatpush1.msra.mxu0 %v802
    %804 = vmatprep.subr.mxu0 0.0
    %805 = vmatpush1.msra.mxu0 0.0
    %806 = vmatprep.subr.mxu0 0.0
    %807 = vmatpush1.msra.mxu0 0.0
    %808 = vmatprep.subr.mxu0 0.0
    %809 = vmatpush1.msra.mxu0 0.0
    %810 = vmatprep.subr.mxu0 0.0
    %811 = vmatpush1.msra.mxu0 0.0
    %812 = vmatprep.subr.mxu0 0.0
    %813 = vmatpush1.msra.mxu0 0.0
    %814 = vmatprep.subr.mxu0 0.0
    %815 = vmatpush1.msra.mxu0 0.0
    %816 = vmatprep.subr.mxu0 0.0
    %817 = vmatpush1.msra.mxu0 0.0
    %818 = vmatprep.subr.mxu0 0.0
    %819 = vmatpush1.msra.mxu0 0.0
    %820 = vmatprep.subr.mxu0 0.0
    %821 = vmatpush1.msra.mxu0 0.0
    %822 = vmatprep.subr.mxu0 0.0
    %823 = vmatpush1.msra.mxu0 0.0
    %824 = vmatprep.subr.mxu0 0.0
    %825 = vmatpush1.msra.mxu0 0.0
    %826 = vmatprep.subr.mxu0 0.0
    %827 = vmatpush1.msra.mxu0 0.0
    %828 = vmatprep.subr.mxu0 0.0
    %829 = vmatpush1.msra.mxu0 0.0
    %830 = vmatprep.subr.mxu0 0.0
    %831 = vmatpush1.msra.mxu0 0.0
    %832 = vmatprep.subr.mxu0 0.0
    %833 = vmatpush1.msra.mxu0 0.0
    %834 = vmatprep.subr.mxu0 0.0
    %835 = vmatpush1.msra.mxu0 0.0
    %836 = vmatprep.mubr.f32.mxu0 0.0
    %v837 = vand.u32 %v732, 4294901760
    %v838 = vsub.f32 %v732, %v837
    %v839 = vand.u32 %v838, 4294901760
    %v840 = vsub.f32 %v838, %v839
    %v841 = vand.u32 %v840, 4294901760
    %842 = vmatmul.mubr.f32.gmra.mrb[0].mxu0 %v841
    %v843 = vpop.f32.mrb[0].mxu0
    %v844 = vadd.f32 %v754, %v843
    %v845 = vpop.f32.mrb[0].mxu0
    %846 = vdwg.mxu0
    %847 = vmatprep.subr.mxu0 0.0
    %v848 = vand.u32 %v733, 4294901760
    %v849 = vsub.f32 %v733, %v848
    %v850 = vand.u32 %v849, 4294901760
    %v851 = vsub.f32 %v849, %v850
    %v852 = vand.u32 %v851, 4294901760
    %853 = vmatpush1.msra.mxu0 %v852
    %854 = vmatprep.subr.mxu0 0.0
    %v855 = vand.u32 %v734, 4294901760
    %v856 = vsub.f32 %v734, %v855
    %v857 = vand.u32 %v856, 4294901760
    %v858 = vsub.f32 %v856, %v857
    %v859 = vand.u32 %v858, 4294901760
    %860 = vmatpush1.msra.mxu0 %v859
    %861 = vmatprep.subr.mxu0 0.0
    %v862 = vand.u32 %v735, 4294901760
    %v863 = vsub.f32 %v735, %v862
    %v864 = vand.u32 %v863, 4294901760
    %v865 = vsub.f32 %v863, %v864
    %v866 = vand.u32 %v865, 4294901760
    %867 = vmatpush1.msra.mxu0 %v866
    %868 = vmatprep.subr.mxu0 0.0
    %v869 = vand.u32 %v736, 4294901760
    %v870 = vsub.f32 %v736, %v869
    %v871 = vand.u32 %v870, 4294901760
    %v872 = vsub.f32 %v870, %v871
    %v873 = vand.u32 %v872, 4294901760
    %874 = vmatpush1.msra.mxu0 %v873
    %875 = vmatprep.subr.mxu0 0.0
    %v876 = vand.u32 %v737, 4294901760
    %v877 = vsub.f32 %v737, %v876
    %v878 = vand.u32 %v877, 4294901760
    %v879 = vsub.f32 %v877, %v878
    %v880 = vand.u32 %v879, 4294901760
    %881 = vmatpush1.msra.mxu0 %v880
    %882 = vmatprep.subr.mxu0 0.0
    %v883 = vand.u32 %v738, 4294901760
    %v884 = vsub.f32 %v738, %v883
    %v885 = vand.u32 %v884, 4294901760
    %v886 = vsub.f32 %v884, %v885
    %v887 = vand.u32 %v886, 4294901760
    %888 = vmatpush1.msra.mxu0 %v887
    %889 = vmatprep.subr.mxu0 0.0
    %v890 = vand.u32 %v739, 4294901760
    %v891 = vsub.f32 %v739, %v890
    %v892 = vand.u32 %v891, 4294901760
    %v893 = vsub.f32 %v891, %v892
    %v894 = vand.u32 %v893, 4294901760
    %895 = vmatpush1.msra.mxu0 %v894
    %896 = vmatprep.subr.mxu0 0.0
    %v897 = vand.u32 %v740, 4294901760
    %v898 = vsub.f32 %v740, %v897
    %v899 = vand.u32 %v898, 4294901760
    %v900 = vsub.f32 %v898, %v899
    %v901 = vand.u32 %v900, 4294901760
    %902 = vmatpush1.msra.mxu0 %v901
    %903 = vmatprep.subr.mxu0 0.0
    %v904 = vand.u32 %v741, 4294901760
    %v905 = vsub.f32 %v741, %v904
    %v906 = vand.u32 %v905, 4294901760
    %v907 = vsub.f32 %v905, %v906
    %v908 = vand.u32 %v907, 4294901760
    %909 = vmatpush1.msra.mxu0 %v908
    %910 = vmatprep.subr.mxu0 0.0
    %v911 = vand.u32 %v742, 4294901760
    %v912 = vsub.f32 %v742, %v911
    %v913 = vand.u32 %v912, 4294901760
    %v914 = vsub.f32 %v912, %v913
    %v915 = vand.u32 %v914, 4294901760
    %916 = vmatpush1.msra.mxu0 %v915
    %917 = vmatprep.subr.mxu0 0.0
    %v918 = vand.u32 %v743, 4294901760
    %v919 = vsub.f32 %v743, %v918
    %v920 = vand.u32 %v919, 4294901760
    %v921 = vsub.f32 %v919, %v920
    %v922 = vand.u32 %v921, 4294901760
    %923 = vmatpush1.msra.mxu0 %v922
    %924 = vmatprep.subr.mxu0 0.0
    %v925 = vand.u32 %v744, 4294901760
    %v926 = vsub.f32 %v744, %v925
    %v927 = vand.u32 %v926, 4294901760
    %v928 = vsub.f32 %v926, %v927
    %v929 = vand.u32 %v928, 4294901760
    %930 = vmatpush1.msra.mxu0 %v929
    %931 = vmatprep.subr.mxu0 0.0
    %v932 = vand.u32 %v745, 4294901760
    %v933 = vsub.f32 %v745, %v932
    %v934 = vand.u32 %v933, 4294901760
    %v935 = vsub.f32 %v933, %v934
    %v936 = vand.u32 %v935, 4294901760
    %937 = vmatpush1.msra.mxu0 %v936
    %938 = vmatprep.subr.mxu0 0.0
    %v939 = vand.u32 %v746, 4294901760
    %v940 = vsub.f32 %v746, %v939
    %v941 = vand.u32 %v940, 4294901760
    %v942 = vsub.f32 %v940, %v941
    %v943 = vand.u32 %v942, 4294901760
    %944 = vmatpush1.msra.mxu0 %v943
    %945 = vmatprep.subr.mxu0 0.0
    %v946 = vand.u32 %v747, 4294901760
    %v947 = vsub.f32 %v747, %v946
    %v948 = vand.u32 %v947, 4294901760
    %v949 = vsub.f32 %v947, %v948
    %v950 = vand.u32 %v949, 4294901760
    %951 = vmatpush1.msra.mxu0 %v950
    %952 = vmatprep.subr.mxu0 0.0
    %v953 = vand.u32 %v748, 4294901760
    %v954 = vsub.f32 %v748, %v953
    %v955 = vand.u32 %v954, 4294901760
    %v956 = vsub.f32 %v954, %v955
    %v957 = vand.u32 %v956, 4294901760
    %958 = vmatpush1.msra.mxu0 %v957
    %959 = vmatprep.subr.mxu0 0.0
    %960 = vmatpush1.msra.mxu0 0.0
    %961 = vmatprep.subr.mxu0 0.0
    %962 = vmatpush1.msra.mxu0 0.0
    %963 = vmatprep.subr.mxu0 0.0
    %964 = vmatpush1.msra.mxu0 0.0
    %965 = vmatprep.subr.mxu0 0.0
    %966 = vmatpush1.msra.mxu0 0.0
    %967 = vmatprep.subr.mxu0 0.0
    %968 = vmatpush1.msra.mxu0 0.0
    %969 = vmatprep.subr.mxu0 0.0
    %970 = vmatpush1.msra.mxu0 0.0
    %971 = vmatprep.subr.mxu0 0.0
    %972 = vmatpush1.msra.mxu0 0.0
    %973 = vmatprep.subr.mxu0 0.0
    %974 = vmatpush1.msra.mxu0 0.0
    %975 = vmatprep.subr.mxu0 0.0
    %976 = vmatpush1.msra.mxu0 0.0
    %977 = vmatprep.subr.mxu0 0.0
    %978 = vmatpush1.msra.mxu0 0.0
    %979 = vmatprep.subr.mxu0 0.0
    %980 = vmatpush1.msra.mxu0 0.0
    %981 = vmatprep.subr.mxu0 0.0
    %982 = vmatpush1.msra.mxu0 0.0
    %983 = vmatprep.subr.mxu0 0.0
    %984 = vmatpush1.msra.mxu0 0.0
    %985 = vmatprep.subr.mxu0 0.0
    %986 = vmatpush1.msra.mxu0 0.0
    %987 = vmatprep.subr.mxu0 0.0
    %988 = vmatpush1.msra.mxu0 0.0
    %989 = vmatprep.subr.mxu0 0.0
    %990 = vmatpush1.msra.mxu0 0.0
    %991 = vmatprep.mubr.f32.mxu0 0.0
    %v992 = vand.u32 %v732, 4294901760
    %993 = vmatmul.mubr.f32.gmra.mrb[0].mxu0 %v992
    %v994 = vpop.f32.mrb[0].mxu0
    %v995 = vadd.f32 %v844, %v994
    %v996 = vpop.f32.mrb[0].mxu0
    %997 = vdwg.mxu0
    %998 = vmatprep.subr.mxu0 0.0
    %v999 = vand.u32 %v733, 4294901760
    %v1000 = vsub.f32 %v733, %v999
    %1001 = vmatpush1.msra.mxu0 %v1000
    %1002 = vmatprep.subr.mxu0 0.0
    %v1003 = vand.u32 %v734, 4294901760
    %v1004 = vsub.f32 %v734, %v1003
    %1005 = vmatpush1.msra.mxu0 %v1004
    %1006 = vmatprep.subr.mxu0 0.0
    %v1007 = vand.u32 %v735, 4294901760
    %v1008 = vsub.f32 %v735, %v1007
    %1009 = vmatpush1.msra.mxu0 %v1008
    %1010 = vmatprep.subr.mxu0 0.0
    %v1011 = vand.u32 %v736, 4294901760
    %v1012 = vsub.f32 %v736, %v1011
    %1013 = vmatpush1.msra.mxu0 %v1012
    %1014 = vmatprep.subr.mxu0 0.0
    %v1015 = vand.u32 %v737, 4294901760
    %v1016 = vsub.f32 %v737, %v1015
    %1017 = vmatpush1.msra.mxu0 %v1016
    %1018 = vmatprep.subr.mxu0 0.0
    %v1019 = vand.u32 %v738, 4294901760
    %v1020 = vsub.f32 %v738, %v1019
    %1021 = vmatpush1.msra.mxu0 %v1020
    %1022 = vmatprep.subr.mxu0 0.0
    %v1023 = vand.u32 %v739, 4294901760
    %v1024 = vsub.f32 %v739, %v1023
    %1025 = vmatpush1.msra.mxu0 %v1024
    %1026 = vmatprep.subr.mxu0 0.0
    %v1027 = vand.u32 %v740, 4294901760
    %v1028 = vsub.f32 %v740, %v1027
    %1029 = vmatpush1.msra.mxu0 %v1028
    %1030 = vmatprep.subr.mxu0 0.0
    %v1031 = vand.u32 %v741, 4294901760
    %v1032 = vsub.f32 %v741, %v1031
    %1033 = vmatpush1.msra.mxu0 %v1032
    %1034 = vmatprep.subr.mxu0 0.0
    %v1035 = vand.u32 %v742, 4294901760
    %v1036 = vsub.f32 %v742, %v1035
    %1037 = vmatpush1.msra.mxu0 %v1036
    %1038 = vmatprep.subr.mxu0 0.0
    %v1039 = vand.u32 %v743, 4294901760
    %v1040 = vsub.f32 %v743, %v1039
    %1041 = vmatpush1.msra.mxu0 %v1040
    %1042 = vmatprep.subr.mxu0 0.0
    %v1043 = vand.u32 %v744, 4294901760
    %v1044 = vsub.f32 %v744, %v1043
    %1045 = vmatpush1.msra.mxu0 %v1044
    %1046 = vmatprep.subr.mxu0 0.0
    %v1047 = vand.u32 %v745, 4294901760
    %v1048 = vsub.f32 %v745, %v1047
    %1049 = vmatpush1.msra.mxu0 %v1048
    %1050 = vmatprep.subr.mxu0 0.0
    %v1051 = vand.u32 %v746, 4294901760
    %v1052 = vsub.f32 %v746, %v1051
    %1053 = vmatpush1.msra.mxu0 %v1052
    %1054 = vmatprep.subr.mxu0 0.0
    %v1055 = vand.u32 %v747, 4294901760
    %v1056 = vsub.f32 %v747, %v1055
    %1057 = vmatpush1.msra.mxu0 %v1056
    %1058 = vmatprep.subr.mxu0 0.0
    %v1059 = vand.u32 %v748, 4294901760
    %v1060 = vsub.f32 %v748, %v1059
    %1061 = vmatpush1.msra.mxu0 %v1060
    %1062 = vmatprep.subr.mxu0 0.0
    %1063 = vmatpush1.msra.mxu0 0.0
    %1064 = vmatprep.subr.mxu0 0.0
    %1065 = vmatpush1.msra.mxu0 0.0
    %1066 = vmatprep.subr.mxu0 0.0
    %1067 = vmatpush1.msra.mxu0 0.0
    %1068 = vmatprep.subr.mxu0 0.0
    %1069 = vmatpush1.msra.mxu0 0.0
    %1070 = vmatprep.subr.mxu0 0.0
    %1071 = vmatpush1.msra.mxu0 0.0
    %1072 = vmatprep.subr.mxu0 0.0
    %1073 = vmatpush1.msra.mxu0 0.0
    %1074 = vmatprep.subr.mxu0 0.0
    %1075 = vmatpush1.msra.mxu0 0.0
    %1076 = vmatprep.subr.mxu0 0.0
    %1077 = vmatpush1.msra.mxu0 0.0
    %1078 = vmatprep.subr.mxu0 0.0
    %1079 = vmatpush1.msra.mxu0 0.0
    %1080 = vmatprep.subr.mxu0 0.0
    %1081 = vmatpush1.msra.mxu0 0.0
    %1082 = vmatprep.subr.mxu0 0.0
    %1083 = vmatpush1.msra.mxu0 0.0
    %1084 = vmatprep.subr.mxu0 0.0
    %1085 = vmatpush1.msra.mxu0 0.0
    %1086 = vmatprep.subr.mxu0 0.0
    %1087 = vmatpush1.msra.mxu0 0.0
    %1088 = vmatprep.subr.mxu0 0.0
    %1089 = vmatpush1.msra.mxu0 0.0
    %1090 = vmatprep.subr.mxu0 0.0
    %1091 = vmatpush1.msra.mxu0 0.0
    %1092 = vmatprep.subr.mxu0 0.0
    %1093 = vmatpush1.msra.mxu0 0.0
    %1094 = vmatprep.mubr.f32.mxu0 0.0
    %v1095 = vand.u32 %v732, 4294901760
    %v1096 = vsub.f32 %v732, %v1095
    %1097 = vmatmul.mubr.f32.gmra.mrb[0].mxu0 %v1096
    %v1098 = vpop.f32.mrb[0].mxu0
    %v1099 = vadd.f32 %v995, %v1098
    %v1100 = vpop.f32.mrb[0].mxu0
    %1101 = vdwg.mxu0
    %1102 = vmatprep.subr.mxu0 0.0
    %v1103 = vand.u32 %v733, 4294901760
    %1104 = vmatpush1.msra.mxu0 %v1103
    %1105 = vmatprep.subr.mxu0 0.0
    %v1106 = vand.u32 %v734, 4294901760
    %1107 = vmatpush1.msra.mxu0 %v1106
    %1108 = vmatprep.subr.mxu0 0.0
    %v1109 = vand.u32 %v735, 4294901760
    %1110 = vmatpush1.msra.mxu0 %v1109
    %1111 = vmatprep.subr.mxu0 0.0
    %v1112 = vand.u32 %v736, 4294901760
    %1113 = vmatpush1.msra.mxu0 %v1112
    %1114 = vmatprep.subr.mxu0 0.0
    %v1115 = vand.u32 %v737, 4294901760
    %1116 = vmatpush1.msra.mxu0 %v1115
    %1117 = vmatprep.subr.mxu0 0.0
    %v1118 = vand.u32 %v738, 4294901760
    %1119 = vmatpush1.msra.mxu0 %v1118
    %1120 = vmatprep.subr.mxu0 0.0
    %v1121 = vand.u32 %v739, 4294901760
    %1122 = vmatpush1.msra.mxu0 %v1121
    %1123 = vmatprep.subr.mxu0 0.0
    %v1124 = vand.u32 %v740, 4294901760
    %1125 = vmatpush1.msra.mxu0 %v1124
    %1126 = vmatprep.subr.mxu0 0.0
    %v1127 = vand.u32 %v741, 4294901760
    %1128 = vmatpush1.msra.mxu0 %v1127
    %1129 = vmatprep.subr.mxu0 0.0
    %v1130 = vand.u32 %v742, 4294901760
    %1131 = vmatpush1.msra.mxu0 %v1130
    %1132 = vmatprep.subr.mxu0 0.0
    %v1133 = vand.u32 %v743, 4294901760
    %1134 = vmatpush1.msra.mxu0 %v1133
    %1135 = vmatprep.subr.mxu0 0.0
    %v1136 = vand.u32 %v744, 4294901760
    %1137 = vmatpush1.msra.mxu0 %v1136
    %1138 = vmatprep.subr.mxu0 0.0
    %v1139 = vand.u32 %v745, 4294901760
    %1140 = vmatpush1.msra.mxu0 %v1139
    %1141 = vmatprep.subr.mxu0 0.0
    %v1142 = vand.u32 %v746, 4294901760
    %1143 = vmatpush1.msra.mxu0 %v1142
    %1144 = vmatprep.subr.mxu0 0.0
    %v1145 = vand.u32 %v747, 4294901760
    %1146 = vmatpush1.msra.mxu0 %v1145
    %1147 = vmatprep.subr.mxu0 0.0
    %v1148 = vand.u32 %v748, 4294901760
    %1149 = vmatpush1.msra.mxu0 %v1148
    %1150 = vmatprep.subr.mxu0 0.0
    %1151 = vmatpush1.msra.mxu0 0.0
    %1152 = vmatprep.subr.mxu0 0.0
    %1153 = vmatpush1.msra.mxu0 0.0
    %1154 = vmatprep.subr.mxu0 0.0
    %1155 = vmatpush1.msra.mxu0 0.0
    %1156 = vmatprep.subr.mxu0 0.0
    %1157 = vmatpush1.msra.mxu0 0.0
    %1158 = vmatprep.subr.mxu0 0.0
    %1159 = vmatpush1.msra.mxu0 0.0
    %1160 = vmatprep.subr.mxu0 0.0
    %1161 = vmatpush1.msra.mxu0 0.0
    %1162 = vmatprep.subr.mxu0 0.0
    %1163 = vmatpush1.msra.mxu0 0.0
    %1164 = vmatprep.subr.mxu0 0.0
    %1165 = vmatpush1.msra.mxu0 0.0
    %1166 = vmatprep.subr.mxu0 0.0
    %1167 = vmatpush1.msra.mxu0 0.0
    %1168 = vmatprep.subr.mxu0 0.0
    %1169 = vmatpush1.msra.mxu0 0.0
    %1170 = vmatprep.subr.mxu0 0.0
    %1171 = vmatpush1.msra.mxu0 0.0
    %1172 = vmatprep.subr.mxu0 0.0
    %1173 = vmatpush1.msra.mxu0 0.0
    %1174 = vmatprep.subr.mxu0 0.0
    %1175 = vmatpush1.msra.mxu0 0.0
    %1176 = vmatprep.subr.mxu0 0.0
    %1177 = vmatpush1.msra.mxu0 0.0
    %1178 = vmatprep.subr.mxu0 0.0
    %1179 = vmatpush1.msra.mxu0 0.0
    %1180 = vmatprep.subr.mxu0 0.0
    %1181 = vmatpush1.msra.mxu0 0.0
    %1182 = vmatprep.mubr.f32.mxu0 0.0
    %v1183 = vand.u32 %v732, 4294901760
    %v1184 = vsub.f32 %v732, %v1183
    %v1185 = vand.u32 %v1184, 4294901760
    %1186 = vmatmul.mubr.f32.gmra.mrb[0].mxu0 %v1185
    %v1187 = vpop.f32.mrb[0].mxu0
    %v1188 = vadd.f32 %v1099, %v1187
    %v1189 = vpop.f32.mrb[0].mxu0
    %1190 = vdwg.mxu0
    %1191 = vmatprep.subr.mxu0 0.0
    %v1192 = vand.u32 %v733, 4294901760
    %v1193 = vsub.f32 %v733, %v1192
    %v1194 = vand.u32 %v1193, 4294901760
    %1195 = vmatpush1.msra.mxu0 %v1194
    %1196 = vmatprep.subr.mxu0 0.0
    %v1197 = vand.u32 %v734, 4294901760
    %v1198 = vsub.f32 %v734, %v1197
    %v1199 = vand.u32 %v1198, 4294901760
    %1200 = vmatpush1.msra.mxu0 %v1199
    %1201 = vmatprep.subr.mxu0 0.0
    %v1202 = vand.u32 %v735, 4294901760
    %v1203 = vsub.f32 %v735, %v1202
    %v1204 = vand.u32 %v1203, 4294901760
    %1205 = vmatpush1.msra.mxu0 %v1204
    %1206 = vmatprep.subr.mxu0 0.0
    %v1207 = vand.u32 %v736, 4294901760
    %v1208 = vsub.f32 %v736, %v1207
    %v1209 = vand.u32 %v1208, 4294901760
    %1210 = vmatpush1.msra.mxu0 %v1209
    %1211 = vmatprep.subr.mxu0 0.0
    %v1212 = vand.u32 %v737, 4294901760
    %v1213 = vsub.f32 %v737, %v1212
    %v1214 = vand.u32 %v1213, 4294901760
    %1215 = vmatpush1.msra.mxu0 %v1214
    %1216 = vmatprep.subr.mxu0 0.0
    %v1217 = vand.u32 %v738, 4294901760
    %v1218 = vsub.f32 %v738, %v1217
    %v1219 = vand.u32 %v1218, 4294901760
    %1220 = vmatpush1.msra.mxu0 %v1219
    %1221 = vmatprep.subr.mxu0 0.0
    %v1222 = vand.u32 %v739, 4294901760
    %v1223 = vsub.f32 %v739, %v1222
    %v1224 = vand.u32 %v1223, 4294901760
    %1225 = vmatpush1.msra.mxu0 %v1224
    %1226 = vmatprep.subr.mxu0 0.0
    %v1227 = vand.u32 %v740, 4294901760
    %v1228 = vsub.f32 %v740, %v1227
    %v1229 = vand.u32 %v1228, 4294901760
    %1230 = vmatpush1.msra.mxu0 %v1229
    %1231 = vmatprep.subr.mxu0 0.0
    %v1232 = vand.u32 %v741, 4294901760
    %v1233 = vsub.f32 %v741, %v1232
    %v1234 = vand.u32 %v1233, 4294901760
    %1235 = vmatpush1.msra.mxu0 %v1234
    %1236 = vmatprep.subr.mxu0 0.0
    %v1237 = vand.u32 %v742, 4294901760
    %v1238 = vsub.f32 %v742, %v1237
    %v1239 = vand.u32 %v1238, 4294901760
    %1240 = vmatpush1.msra.mxu0 %v1239
    %1241 = vmatprep.subr.mxu0 0.0
    %v1242 = vand.u32 %v743, 4294901760
    %v1243 = vsub.f32 %v743, %v1242
    %v1244 = vand.u32 %v1243, 4294901760
    %1245 = vmatpush1.msra.mxu0 %v1244
    %1246 = vmatprep.subr.mxu0 0.0
    %v1247 = vand.u32 %v744, 4294901760
    %v1248 = vsub.f32 %v744, %v1247
    %v1249 = vand.u32 %v1248, 4294901760
    %1250 = vmatpush1.msra.mxu0 %v1249
    %1251 = vmatprep.subr.mxu0 0.0
    %v1252 = vand.u32 %v745, 4294901760
    %v1253 = vsub.f32 %v745, %v1252
    %v1254 = vand.u32 %v1253, 4294901760
    %1255 = vmatpush1.msra.mxu0 %v1254
    %1256 = vmatprep.subr.mxu0 0.0
    %v1257 = vand.u32 %v746, 4294901760
    %v1258 = vsub.f32 %v746, %v1257
    %v1259 = vand.u32 %v1258, 4294901760
    %1260 = vmatpush1.msra.mxu0 %v1259
    %1261 = vmatprep.subr.mxu0 0.0
    %v1262 = vand.u32 %v747, 4294901760
    %v1263 = vsub.f32 %v747, %v1262
    %v1264 = vand.u32 %v1263, 4294901760
    %1265 = vmatpush1.msra.mxu0 %v1264
    %1266 = vmatprep.subr.mxu0 0.0
    %v1267 = vand.u32 %v748, 4294901760
    %v1268 = vsub.f32 %v748, %v1267
    %v1269 = vand.u32 %v1268, 4294901760
    %1270 = vmatpush1.msra.mxu0 %v1269
    %1271 = vmatprep.subr.mxu0 0.0
    %1272 = vmatpush1.msra.mxu0 0.0
    %1273 = vmatprep.subr.mxu0 0.0
    %1274 = vmatpush1.msra.mxu0 0.0
    %1275 = vmatprep.subr.mxu0 0.0
    %1276 = vmatpush1.msra.mxu0 0.0
    %1277 = vmatprep.subr.mxu0 0.0
    %1278 = vmatpush1.msra.mxu0 0.0
    %1279 = vmatprep.subr.mxu0 0.0
    %1280 = vmatpush1.msra.mxu0 0.0
    %1281 = vmatprep.subr.mxu0 0.0
    %1282 = vmatpush1.msra.mxu0 0.0
    %1283 = vmatprep.subr.mxu0 0.0
    %1284 = vmatpush1.msra.mxu0 0.0
    %1285 = vmatprep.subr.mxu0 0.0
    %1286 = vmatpush1.msra.mxu0 0.0
    %1287 = vmatprep.subr.mxu0 0.0
    %1288 = vmatpush1.msra.mxu0 0.0
    %1289 = vmatprep.subr.mxu0 0.0
    %1290 = vmatpush1.msra.mxu0 0.0
    %1291 = vmatprep.subr.mxu0 0.0
    %1292 = vmatpush1.msra.mxu0 0.0
    %1293 = vmatprep.subr.mxu0 0.0
    %1294 = vmatpush1.msra.mxu0 0.0
    %1295 = vmatprep.subr.mxu0 0.0
    %1296 = vmatpush1.msra.mxu0 0.0
    %1297 = vmatprep.subr.mxu0 0.0
    %1298 = vmatpush1.msra.mxu0 0.0
    %1299 = vmatprep.subr.mxu0 0.0
    %1300 = vmatpush1.msra.mxu0 0.0
    %1301 = vmatprep.subr.mxu0 0.0
    %1302 = vmatpush1.msra.mxu0 0.0
    %1303 = vmatprep.mubr.f32.mxu0 0.0
    %v1304 = vand.u32 %v732, 4294901760
    %1305 = vmatmul.mubr.f32.gmra.mrb[0].mxu0 %v1304
    %v1306 = vpop.f32.mrb[0].mxu0
    %v1307 = vadd.f32 %v1188, %v1306
    %v1308 = vpop.f32.mrb[0].mxu0
    %1309 = vdwg.mxu0
    %1310 = vmatprep.subr.mxu0 0.0
    %v1311 = vand.u32 %v733, 4294901760
    %1312 = vmatpush1.msra.mxu0 %v1311
    %1313 = vmatprep.subr.mxu0 0.0
    %v1314 = vand.u32 %v734, 4294901760
    %1315 = vmatpush1.msra.mxu0 %v1314
    %1316 = vmatprep.subr.mxu0 0.0
    %v1317 = vand.u32 %v735, 4294901760
    %1318 = vmatpush1.msra.mxu0 %v1317
    %1319 = vmatprep.subr.mxu0 0.0
    %v1320 = vand.u32 %v736, 4294901760
    %1321 = vmatpush1.msra.mxu0 %v1320
    %1322 = vmatprep.subr.mxu0 0.0
    %v1323 = vand.u32 %v737, 4294901760
    %1324 = vmatpush1.msra.mxu0 %v1323
    %1325 = vmatprep.subr.mxu0 0.0
    %v1326 = vand.u32 %v738, 4294901760
    %1327 = vmatpush1.msra.mxu0 %v1326
    %1328 = vmatprep.subr.mxu0 0.0
    %v1329 = vand.u32 %v739, 4294901760
    %1330 = vmatpush1.msra.mxu0 %v1329
    %1331 = vmatprep.subr.mxu0 0.0
    %v1332 = vand.u32 %v740, 4294901760
    %1333 = vmatpush1.msra.mxu0 %v1332
    %1334 = vmatprep.subr.mxu0 0.0
    %v1335 = vand.u32 %v741, 4294901760
    %1336 = vmatpush1.msra.mxu0 %v1335
    %1337 = vmatprep.subr.mxu0 0.0
    %v1338 = vand.u32 %v742, 4294901760
    %1339 = vmatpush1.msra.mxu0 %v1338
    %1340 = vmatprep.subr.mxu0 0.0
    %v1341 = vand.u32 %v743, 4294901760
    %1342 = vmatpush1.msra.mxu0 %v1341
    %1343 = vmatprep.subr.mxu0 0.0
    %v1344 = vand.u32 %v744, 4294901760
    %1345 = vmatpush1.msra.mxu0 %v1344
    %1346 = vmatprep.subr.mxu0 0.0
    %v1347 = vand.u32 %v745, 4294901760
    %1348 = vmatpush1.msra.mxu0 %v1347
    %1349 = vmatprep.subr.mxu0 0.0
    %v1350 = vand.u32 %v746, 4294901760
    %1351 = vmatpush1.msra.mxu0 %v1350
    %1352 = vmatprep.subr.mxu0 0.0
    %v1353 = vand.u32 %v747, 4294901760
    %1354 = vmatpush1.msra.mxu0 %v1353
    %1355 = vmatprep.subr.mxu0 0.0
    %v1356 = vand.u32 %v748, 4294901760
    %1357 = vmatpush1.msra.mxu0 %v1356
    %1358 = vmatprep.subr.mxu0 0.0
    %1359 = vmatpush1.msra.mxu0 0.0
    %1360 = vmatprep.subr.mxu0 0.0
    %1361 = vmatpush1.msra.mxu0 0.0
    %1362 = vmatprep.subr.mxu0 0.0
    %1363 = vmatpush1.msra.mxu0 0.0
    %1364 = vmatprep.subr.mxu0 0.0
    %1365 = vmatpush1.msra.mxu0 0.0
    %1366 = vmatprep.subr.mxu0 0.0
    %1367 = vmatpush1.msra.mxu0 0.0
    %1368 = vmatprep.subr.mxu0 0.0
    %1369 = vmatpush1.msra.mxu0 0.0
    %1370 = vmatprep.subr.mxu0 0.0
    %1371 = vmatpush1.msra.mxu0 0.0
    %1372 = vmatprep.subr.mxu0 0.0
    %1373 = vmatpush1.msra.mxu0 0.0
    %1374 = vmatprep.subr.mxu0 0.0
    %1375 = vmatpush1.msra.mxu0 0.0
    %1376 = vmatprep.subr.mxu0 0.0
    %1377 = vmatpush1.msra.mxu0 0.0
    %1378 = vmatprep.subr.mxu0 0.0
    %1379 = vmatpush1.msra.mxu0 0.0
    %1380 = vmatprep.subr.mxu0 0.0
    %1381 = vmatpush1.msra.mxu0 0.0
    %1382 = vmatprep.subr.mxu0 0.0
    %1383 = vmatpush1.msra.mxu0 0.0
    %1384 = vmatprep.subr.mxu0 0.0
    %1385 = vmatpush1.msra.mxu0 0.0
    %1386 = vmatprep.subr.mxu0 0.0
    %1387 = vmatpush1.msra.mxu0 0.0
    %1388 = vmatprep.subr.mxu0 0.0
    %1389 = vmatpush1.msra.mxu0 0.0
    %1390 = vmatprep.mubr.f32.mxu0 0.0
    %v1391 = vand.u32 %v732, 4294901760
    %1392 = vmatmul.mubr.f32.gmra.mrb[0].mxu0 %v1391
    %v1393 = vpop.f32.mrb[0].mxu0
    %v1394 = vadd.f32 %v1307, %v1393
    %v1395 = vpop.f32.mrb[0].mxu0
    %1396 = vdwg.mxu0
    %v1397 = vmax.f32 %v1394, 0.0
    %v1398 = vld [vmem:[#allocation6] sm:$0xff]
    %v1399 = vld [vmem:[#allocation6 + $0x8] sm:$0xff]
    %v1400 = vld [vmem:[#allocation6 + $0x10] sm:$0xff]
    %v1401 = vld [vmem:[#allocation6 + $0x18] sm:$0xff]
    %v1402 = vld [vmem:[#allocation6 + $0x20] sm:$0xff]
    %v1403 = vld [vmem:[#allocation6 + $0x28] sm:$0xff]
    %v1404 = vld [vmem:[#allocation6 + $0x30] sm:$0xff]
    %v1405 = vld [vmem:[#allocation6 + $0x38] sm:$0xff]
    %v1406 = vld [vmem:[#allocation6 + $0x40] sm:$0xff]
    %v1407 = vld [vmem:[#allocation6 + $0x48] sm:$0xff]
    %v1408 = vld [vmem:[#allocation6 + $0x50] sm:$0xff]
    %v1409 = vld [vmem:[#allocation6 + $0x58] sm:$0xff]
    %v1410 = vld [vmem:[#allocation6 + $0x60] sm:$0xff]
    %v1411 = vld [vmem:[#allocation6 + $0x68] sm:$0xff]
    %v1412 = vld [vmem:[#allocation6 + $0x70] sm:$0xff]
    %v1413 = vld [vmem:[#allocation6 + $0x78] sm:$0xff]
    %v1414 = vld [vmem:[#allocation6 + $0x80] sm:$0xff]
    %v1415 = vld [vmem:[#allocation6 + $0x88] sm:$0xff]
    %v1416 = vld [vmem:[#allocation6 + $0x90] sm:$0xff]
    %v1417 = vld [vmem:[#allocation6 + $0x98] sm:$0xff]
    %v1418 = vld [vmem:[#allocation6 + $0xa0] sm:$0xff]
    %v1419 = vld [vmem:[#allocation6 + $0xa8] sm:$0xff]
    %v1420 = vld [vmem:[#allocation6 + $0xb0] sm:$0xff]
    %v1421 = vld [vmem:[#allocation6 + $0xb8] sm:$0xff]
    %v1422 = vld [vmem:[#allocation6 + $0xc0] sm:$0xff]
    %v1423 = vld [vmem:[#allocation6 + $0xc8] sm:$0xff]
    %v1424 = vld [vmem:[#allocation6 + $0xd0] sm:$0xff]
    %v1425 = vld [vmem:[#allocation6 + $0xd8] sm:$0xff]
    %v1426 = vld [vmem:[#allocation6 + $0xe0] sm:$0xff]
    %v1427 = vld [vmem:[#allocation6 + $0xe8] sm:$0xff]
    %v1428 = vld [vmem:[#allocation6 + $0xf0] sm:$0xff]
    %v1429 = vld [vmem:[#allocation6 + $0xf8] sm:$0xff]
    %v1430 = vld [vmem:[%s6] sm:$0x3]
    %v1432 = vlaneseq
    %v1433 = vshrl.u32 %v1432, 7
    %v1434 = vsub.s32 0, %v1433
    %v1435 = vrot.slane %v1430, %v1434
    %v1436 = vlaneseq
    %v1437 = vshrl.u32 %v1436, 7
    %v1438 = vsub.s32 1, %v1437
    %v1439 = vrot.slane %v1430, %v1438
    %v1442 = vand.u32 %v1399, 4294901760
    %1443 = vmatprep.subr.mxu0 %v1442
    %v1444 = vand.u32 %v1398, 4294901760
    %1445 = vmatpush1.msra.mxu0 %v1444
    %v1446 = vand.u32 %v1401, 4294901760
    %1447 = vmatprep.subr.mxu0 %v1446
    %v1448 = vand.u32 %v1400, 4294901760
    %1449 = vmatpush1.msra.mxu0 %v1448
    %v1450 = vand.u32 %v1403, 4294901760
    %1451 = vmatprep.subr.mxu0 %v1450
    %v1452 = vand.u32 %v1402, 4294901760
    %1453 = vmatpush1.msra.mxu0 %v1452
    %v1454 = vand.u32 %v1405, 4294901760
    %1455 = vmatprep.subr.mxu0 %v1454
    %v1456 = vand.u32 %v1404, 4294901760
    %1457 = vmatpush1.msra.mxu0 %v1456
    %v1458 = vand.u32 %v1407, 4294901760
    %1459 = vmatprep.subr.mxu0 %v1458
    %v1460 = vand.u32 %v1406, 4294901760
    %1461 = vmatpush1.msra.mxu0 %v1460
    %v1462 = vand.u32 %v1409, 4294901760
    %1463 = vmatprep.subr.mxu0 %v1462
    %v1464 = vand.u32 %v1408, 4294901760
    %1465 = vmatpush1.msra.mxu0 %v1464
    %v1466 = vand.u32 %v1411, 4294901760
    %1467 = vmatprep.subr.mxu0 %v1466
    %v1468 = vand.u32 %v1410, 4294901760
    %1469 = vmatpush1.msra.mxu0 %v1468
    %v1470 = vand.u32 %v1413, 4294901760
    %1471 = vmatprep.subr.mxu0 %v1470
    %v1472 = vand.u32 %v1412, 4294901760
    %1473 = vmatpush1.msra.mxu0 %v1472
    %v1474 = vand.u32 %v1415, 4294901760
    %1475 = vmatprep.subr.mxu0 %v1474
    %v1476 = vand.u32 %v1414, 4294901760
    %1477 = vmatpush1.msra.mxu0 %v1476
    %v1478 = vand.u32 %v1417, 4294901760
    %1479 = vmatprep.subr.mxu0 %v1478
    %v1480 = vand.u32 %v1416, 4294901760
    %1481 = vmatpush1.msra.mxu0 %v1480
    %v1482 = vand.u32 %v1419, 4294901760
    %1483 = vmatprep.subr.mxu0 %v1482
    %v1484 = vand.u32 %v1418, 4294901760
    %1485 = vmatpush1.msra.mxu0 %v1484
    %v1486 = vand.u32 %v1421, 4294901760
    %1487 = vmatprep.subr.mxu0 %v1486
    %v1488 = vand.u32 %v1420, 4294901760
    %1489 = vmatpush1.msra.mxu0 %v1488
    %v1490 = vand.u32 %v1423, 4294901760
    %1491 = vmatprep.subr.mxu0 %v1490
    %v1492 = vand.u32 %v1422, 4294901760
    %1493 = vmatpush1.msra.mxu0 %v1492
    %v1494 = vand.u32 %v1425, 4294901760
    %1495 = vmatprep.subr.mxu0 %v1494
    %v1496 = vand.u32 %v1424, 4294901760
    %1497 = vmatpush1.msra.mxu0 %v1496
    %v1498 = vand.u32 %v1427, 4294901760
    %1499 = vmatprep.subr.mxu0 %v1498
    %v1500 = vand.u32 %v1426, 4294901760
    %1501 = vmatpush1.msra.mxu0 %v1500
    %v1502 = vand.u32 %v1429, 4294901760
    %1503 = vmatprep.subr.mxu0 %v1502
    %v1504 = vand.u32 %v1428, 4294901760
    %1505 = vmatpush1.msra.mxu0 %v1504
    %1506 = vmatprep.subr.mxu0 0.0
    %1507 = vmatpush1.msra.mxu0 0.0
    %1508 = vmatprep.subr.mxu0 0.0
    %1509 = vmatpush1.msra.mxu0 0.0
    %1510 = vmatprep.subr.mxu0 0.0
    %1511 = vmatpush1.msra.mxu0 0.0
    %1512 = vmatprep.subr.mxu0 0.0
    %1513 = vmatpush1.msra.mxu0 0.0
    %1514 = vmatprep.subr.mxu0 0.0
    %1515 = vmatpush1.msra.mxu0 0.0
    %1516 = vmatprep.subr.mxu0 0.0
    %1517 = vmatpush1.msra.mxu0 0.0
    %1518 = vmatprep.subr.mxu0 0.0
    %1519 = vmatpush1.msra.mxu0 0.0
    %1520 = vmatprep.subr.mxu0 0.0
    %1521 = vmatpush1.msra.mxu0 0.0
    %1522 = vmatprep.subr.mxu0 0.0
    %1523 = vmatpush1.msra.mxu0 0.0
    %1524 = vmatprep.subr.mxu0 0.0
    %1525 = vmatpush1.msra.mxu0 0.0
    %1526 = vmatprep.subr.mxu0 0.0
    %1527 = vmatpush1.msra.mxu0 0.0
    %1528 = vmatprep.subr.mxu0 0.0
    %1529 = vmatpush1.msra.mxu0 0.0
    %1530 = vmatprep.subr.mxu0 0.0
    %1531 = vmatpush1.msra.mxu0 0.0
    %1532 = vmatprep.subr.mxu0 0.0
    %1533 = vmatpush1.msra.mxu0 0.0
    %1534 = vmatprep.subr.mxu0 0.0
    %1535 = vmatpush1.msra.mxu0 0.0
    %1536 = vmatprep.subr.mxu0 0.0
    %1537 = vmatpush1.msra.mxu0 0.0
    %1538 = vmatprep.mubr.f32.mxu0 0.0
    %v1539 = vand.u32 %v1397, 4294901760
    %v1540 = vsub.f32 %v1397, %v1539
    %v1541 = vand.u32 %v1540, 4294901760
    %v1542 = vsub.f32 %v1540, %v1541
    %v1543 = vand.u32 %v1542, 4294901760
    %1544 = vmatmul.mubr.f32.gmra.mrb[0].mxu0 %v1543
    %v1545 = vpop.f32.mrb[0].mxu0
    %v1546 = vadd.f32 %v1435, %v1545
    %v1547 = vpop.f32.mrb[0].mxu0
    %v1548 = vadd.f32 %v1439, %v1547
    %1549 = vdwg.mxu0
    %v1550 = vand.u32 %v1399, 4294901760
    %v1551 = vsub.f32 %v1399, %v1550
    %v1552 = vand.u32 %v1551, 4294901760
    %v1553 = vsub.f32 %v1551, %v1552
    %v1554 = vand.u32 %v1553, 4294901760
    %1555 = vmatprep.subr.mxu0 %v1554
    %v1556 = vand.u32 %v1398, 4294901760
    %v1557 = vsub.f32 %v1398, %v1556
    %v1558 = vand.u32 %v1557, 4294901760
    %v1559 = vsub.f32 %v1557, %v1558
    %v1560 = vand.u32 %v1559, 4294901760
    %1561 = vmatpush1.msra.mxu0 %v1560
    %v1562 = vand.u32 %v1401, 4294901760
    %v1563 = vsub.f32 %v1401, %v1562
    %v1564 = vand.u32 %v1563, 4294901760
    %v1565 = vsub.f32 %v1563, %v1564
    %v1566 = vand.u32 %v1565, 4294901760
    %1567 = vmatprep.subr.mxu0 %v1566
    %v1568 = vand.u32 %v1400, 4294901760
    %v1569 = vsub.f32 %v1400, %v1568
    %v1570 = vand.u32 %v1569, 4294901760
    %v1571 = vsub.f32 %v1569, %v1570
    %v1572 = vand.u32 %v1571, 4294901760
    %1573 = vmatpush1.msra.mxu0 %v1572
    %v1574 = vand.u32 %v1403, 4294901760
    %v1575 = vsub.f32 %v1403, %v1574
    %v1576 = vand.u32 %v1575, 4294901760
    %v1577 = vsub.f32 %v1575, %v1576
    %v1578 = vand.u32 %v1577, 4294901760
    %1579 = vmatprep.subr.mxu0 %v1578
    %v1580 = vand.u32 %v1402, 4294901760
    %v1581 = vsub.f32 %v1402, %v1580
    %v1582 = vand.u32 %v1581, 4294901760
    %v1583 = vsub.f32 %v1581, %v1582
    %v1584 = vand.u32 %v1583, 4294901760
    %1585 = vmatpush1.msra.mxu0 %v1584
    %v1586 = vand.u32 %v1405, 4294901760
    %v1587 = vsub.f32 %v1405, %v1586
    %v1588 = vand.u32 %v1587, 4294901760
    %v1589 = vsub.f32 %v1587, %v1588
    %v1590 = vand.u32 %v1589, 4294901760
    %1591 = vmatprep.subr.mxu0 %v1590
    %v1592 = vand.u32 %v1404, 4294901760
    %v1593 = vsub.f32 %v1404, %v1592
    %v1594 = vand.u32 %v1593, 4294901760
    %v1595 = vsub.f32 %v1593, %v1594
    %v1596 = vand.u32 %v1595, 4294901760
    %1597 = vmatpush1.msra.mxu0 %v1596
    %v1598 = vand.u32 %v1407, 4294901760
    %v1599 = vsub.f32 %v1407, %v1598
    %v1600 = vand.u32 %v1599, 4294901760
    %v1601 = vsub.f32 %v1599, %v1600
    %v1602 = vand.u32 %v1601, 4294901760
    %1603 = vmatprep.subr.mxu0 %v1602
    %v1604 = vand.u32 %v1406, 4294901760
    %v1605 = vsub.f32 %v1406, %v1604
    %v1606 = vand.u32 %v1605, 4294901760
    %v1607 = vsub.f32 %v1605, %v1606
    %v1608 = vand.u32 %v1607, 4294901760
    %1609 = vmatpush1.msra.mxu0 %v1608
    %v1610 = vand.u32 %v1409, 4294901760
    %v1611 = vsub.f32 %v1409, %v1610
    %v1612 = vand.u32 %v1611, 4294901760
    %v1613 = vsub.f32 %v1611, %v1612
    %v1614 = vand.u32 %v1613, 4294901760
    %1615 = vmatprep.subr.mxu0 %v1614
    %v1616 = vand.u32 %v1408, 4294901760
    %v1617 = vsub.f32 %v1408, %v1616
    %v1618 = vand.u32 %v1617, 4294901760
    %v1619 = vsub.f32 %v1617, %v1618
    %v1620 = vand.u32 %v1619, 4294901760
    %1621 = vmatpush1.msra.mxu0 %v1620
    %v1622 = vand.u32 %v1411, 4294901760
    %v1623 = vsub.f32 %v1411, %v1622
    %v1624 = vand.u32 %v1623, 4294901760
    %v1625 = vsub.f32 %v1623, %v1624
    %v1626 = vand.u32 %v1625, 4294901760
    %1627 = vmatprep.subr.mxu0 %v1626
    %v1628 = vand.u32 %v1410, 4294901760
    %v1629 = vsub.f32 %v1410, %v1628
    %v1630 = vand.u32 %v1629, 4294901760
    %v1631 = vsub.f32 %v1629, %v1630
    %v1632 = vand.u32 %v1631, 4294901760
    %1633 = vmatpush1.msra.mxu0 %v1632
    %v1634 = vand.u32 %v1413, 4294901760
    %v1635 = vsub.f32 %v1413, %v1634
    %v1636 = vand.u32 %v1635, 4294901760
    %v1637 = vsub.f32 %v1635, %v1636
    %v1638 = vand.u32 %v1637, 4294901760
    %1639 = vmatprep.subr.mxu0 %v1638
    %v1640 = vand.u32 %v1412, 4294901760
    %v1641 = vsub.f32 %v1412, %v1640
    %v1642 = vand.u32 %v1641, 4294901760
    %v1643 = vsub.f32 %v1641, %v1642
    %v1644 = vand.u32 %v1643, 4294901760
    %1645 = vmatpush1.msra.mxu0 %v1644
    %v1646 = vand.u32 %v1415, 4294901760
    %v1647 = vsub.f32 %v1415, %v1646
    %v1648 = vand.u32 %v1647, 4294901760
    %v1649 = vsub.f32 %v1647, %v1648
    %v1650 = vand.u32 %v1649, 4294901760
    %1651 = vmatprep.subr.mxu0 %v1650
    %v1652 = vand.u32 %v1414, 4294901760
    %v1653 = vsub.f32 %v1414, %v1652
    %v1654 = vand.u32 %v1653, 4294901760
    %v1655 = vsub.f32 %v1653, %v1654
    %v1656 = vand.u32 %v1655, 4294901760
    %1657 = vmatpush1.msra.mxu0 %v1656
    %v1658 = vand.u32 %v1417, 4294901760
    %v1659 = vsub.f32 %v1417, %v1658
    %v1660 = vand.u32 %v1659, 4294901760
    %v1661 = vsub.f32 %v1659, %v1660
    %v1662 = vand.u32 %v1661, 4294901760
    %1663 = vmatprep.subr.mxu0 %v1662
    %v1664 = vand.u32 %v1416, 4294901760
    %v1665 = vsub.f32 %v1416, %v1664
    %v1666 = vand.u32 %v1665, 4294901760
    %v1667 = vsub.f32 %v1665, %v1666
    %v1668 = vand.u32 %v1667, 4294901760
    %1669 = vmatpush1.msra.mxu0 %v1668
    %v1670 = vand.u32 %v1419, 4294901760
    %v1671 = vsub.f32 %v1419, %v1670
    %v1672 = vand.u32 %v1671, 4294901760
    %v1673 = vsub.f32 %v1671, %v1672
    %v1674 = vand.u32 %v1673, 4294901760
    %1675 = vmatprep.subr.mxu0 %v1674
    %v1676 = vand.u32 %v1418, 4294901760
    %v1677 = vsub.f32 %v1418, %v1676
    %v1678 = vand.u32 %v1677, 4294901760
    %v1679 = vsub.f32 %v1677, %v1678
    %v1680 = vand.u32 %v1679, 4294901760
    %1681 = vmatpush1.msra.mxu0 %v1680
    %v1682 = vand.u32 %v1421, 4294901760
    %v1683 = vsub.f32 %v1421, %v1682
    %v1684 = vand.u32 %v1683, 4294901760
    %v1685 = vsub.f32 %v1683, %v1684
    %v1686 = vand.u32 %v1685, 4294901760
    %1687 = vmatprep.subr.mxu0 %v1686
    %v1688 = vand.u32 %v1420, 4294901760
    %v1689 = vsub.f32 %v1420, %v1688
    %v1690 = vand.u32 %v1689, 4294901760
    %v1691 = vsub.f32 %v1689, %v1690
    %v1692 = vand.u32 %v1691, 4294901760
    %1693 = vmatpush1.msra.mxu0 %v1692
    %v1694 = vand.u32 %v1423, 4294901760
    %v1695 = vsub.f32 %v1423, %v1694
    %v1696 = vand.u32 %v1695, 4294901760
    %v1697 = vsub.f32 %v1695, %v1696
    %v1698 = vand.u32 %v1697, 4294901760
    %1699 = vmatprep.subr.mxu0 %v1698
    %v1700 = vand.u32 %v1422, 4294901760
    %v1701 = vsub.f32 %v1422, %v1700
    %v1702 = vand.u32 %v1701, 4294901760
    %v1703 = vsub.f32 %v1701, %v1702
    %v1704 = vand.u32 %v1703, 4294901760
    %1705 = vmatpush1.msra.mxu0 %v1704
    %v1706 = vand.u32 %v1425, 4294901760
    %v1707 = vsub.f32 %v1425, %v1706
    %v1708 = vand.u32 %v1707, 4294901760
    %v1709 = vsub.f32 %v1707, %v1708
    %v1710 = vand.u32 %v1709, 4294901760
    %1711 = vmatprep.subr.mxu0 %v1710
    %v1712 = vand.u32 %v1424, 4294901760
    %v1713 = vsub.f32 %v1424, %v1712
    %v1714 = vand.u32 %v1713, 4294901760
    %v1715 = vsub.f32 %v1713, %v1714
    %v1716 = vand.u32 %v1715, 4294901760
    %1717 = vmatpush1.msra.mxu0 %v1716
    %v1718 = vand.u32 %v1427, 4294901760
    %v1719 = vsub.f32 %v1427, %v1718
    %v1720 = vand.u32 %v1719, 4294901760
    %v1721 = vsub.f32 %v1719, %v1720
    %v1722 = vand.u32 %v1721, 4294901760
    %1723 = vmatprep.subr.mxu0 %v1722
    %v1724 = vand.u32 %v1426, 4294901760
    %v1725 = vsub.f32 %v1426, %v1724
    %v1726 = vand.u32 %v1725, 4294901760
    %v1727 = vsub.f32 %v1725, %v1726
    %v1728 = vand.u32 %v1727, 4294901760
    %1729 = vmatpush1.msra.mxu0 %v1728
    %v1730 = vand.u32 %v1429, 4294901760
    %v1731 = vsub.f32 %v1429, %v1730
    %v1732 = vand.u32 %v1731, 4294901760
    %v1733 = vsub.f32 %v1731, %v1732
    %v1734 = vand.u32 %v1733, 4294901760
    %1735 = vmatprep.subr.mxu0 %v1734
    %v1736 = vand.u32 %v1428, 4294901760
    %v1737 = vsub.f32 %v1428, %v1736
    %v1738 = vand.u32 %v1737, 4294901760
    %v1739 = vsub.f32 %v1737, %v1738
    %v1740 = vand.u32 %v1739, 4294901760
    %1741 = vmatpush1.msra.mxu0 %v1740
    %1742 = vmatprep.subr.mxu0 0.0
    %1743 = vmatpush1.msra.mxu0 0.0
    %1744 = vmatprep.subr.mxu0 0.0
    %1745 = vmatpush1.msra.mxu0 0.0
    %1746 = vmatprep.subr.mxu0 0.0
    %1747 = vmatpush1.msra.mxu0 0.0
    %1748 = vmatprep.subr.mxu0 0.0
    %1749 = vmatpush1.msra.mxu0 0.0
    %1750 = vmatprep.subr.mxu0 0.0
    %1751 = vmatpush1.msra.mxu0 0.0
    %1752 = vmatprep.subr.mxu0 0.0
    %1753 = vmatpush1.msra.mxu0 0.0
    %1754 = vmatprep.subr.mxu0 0.0
    %1755 = vmatpush1.msra.mxu0 0.0
    %1756 = vmatprep.subr.mxu0 0.0
    %1757 = vmatpush1.msra.mxu0 0.0
    %1758 = vmatprep.subr.mxu0 0.0
    %1759 = vmatpush1.msra.mxu0 0.0
    %1760 = vmatprep.subr.mxu0 0.0
    %1761 = vmatpush1.msra.mxu0 0.0
    %1762 = vmatprep.subr.mxu0 0.0
    %1763 = vmatpush1.msra.mxu0 0.0
    %1764 = vmatprep.subr.mxu0 0.0
    %1765 = vmatpush1.msra.mxu0 0.0
    %1766 = vmatprep.subr.mxu0 0.0
    %1767 = vmatpush1.msra.mxu0 0.0
    %1768 = vmatprep.subr.mxu0 0.0
    %1769 = vmatpush1.msra.mxu0 0.0
    %1770 = vmatprep.subr.mxu0 0.0
    %1771 = vmatpush1.msra.mxu0 0.0
    %1772 = vmatprep.subr.mxu0 0.0
    %1773 = vmatpush1.msra.mxu0 0.0
    %1774 = vmatprep.mubr.f32.mxu0 0.0
    %v1775 = vand.u32 %v1397, 4294901760
    %1776 = vmatmul.mubr.f32.gmra.mrb[0].mxu0 %v1775
    %v1777 = vpop.f32.mrb[0].mxu0
    %v1778 = vadd.f32 %v1546, %v1777
    %v1779 = vpop.f32.mrb[0].mxu0
    %v1780 = vadd.f32 %v1548, %v1779
    %1781 = vdwg.mxu0
    %v1782 = vand.u32 %v1399, 4294901760
    %v1783 = vsub.f32 %v1399, %v1782
    %1784 = vmatprep.subr.mxu0 %v1783
    %v1785 = vand.u32 %v1398, 4294901760
    %v1786 = vsub.f32 %v1398, %v1785
    %1787 = vmatpush1.msra.mxu0 %v1786
    %v1788 = vand.u32 %v1401, 4294901760
    %v1789 = vsub.f32 %v1401, %v1788
    %1790 = vmatprep.subr.mxu0 %v1789
    %v1791 = vand.u32 %v1400, 4294901760
    %v1792 = vsub.f32 %v1400, %v1791
    %1793 = vmatpush1.msra.mxu0 %v1792
    %v1794 = vand.u32 %v1403, 4294901760
    %v1795 = vsub.f32 %v1403, %v1794
    %1796 = vmatprep.subr.mxu0 %v1795
    %v1797 = vand.u32 %v1402, 4294901760
    %v1798 = vsub.f32 %v1402, %v1797
    %1799 = vmatpush1.msra.mxu0 %v1798
    %v1800 = vand.u32 %v1405, 4294901760
    %v1801 = vsub.f32 %v1405, %v1800
    %1802 = vmatprep.subr.mxu0 %v1801
    %v1803 = vand.u32 %v1404, 4294901760
    %v1804 = vsub.f32 %v1404, %v1803
    %1805 = vmatpush1.msra.mxu0 %v1804
    %v1806 = vand.u32 %v1407, 4294901760
    %v1807 = vsub.f32 %v1407, %v1806
    %1808 = vmatprep.subr.mxu0 %v1807
    %v1809 = vand.u32 %v1406, 4294901760
    %v1810 = vsub.f32 %v1406, %v1809
    %1811 = vmatpush1.msra.mxu0 %v1810
    %v1812 = vand.u32 %v1409, 4294901760
    %v1813 = vsub.f32 %v1409, %v1812
    %1814 = vmatprep.subr.mxu0 %v1813
    %v1815 = vand.u32 %v1408, 4294901760
    %v1816 = vsub.f32 %v1408, %v1815
    %1817 = vmatpush1.msra.mxu0 %v1816
    %v1818 = vand.u32 %v1411, 4294901760
    %v1819 = vsub.f32 %v1411, %v1818
    %1820 = vmatprep.subr.mxu0 %v1819
    %v1821 = vand.u32 %v1410, 4294901760
    %v1822 = vsub.f32 %v1410, %v1821
    %1823 = vmatpush1.msra.mxu0 %v1822
    %v1824 = vand.u32 %v1413, 4294901760
    %v1825 = vsub.f32 %v1413, %v1824
    %1826 = vmatprep.subr.mxu0 %v1825
    %v1827 = vand.u32 %v1412, 4294901760
    %v1828 = vsub.f32 %v1412, %v1827
    %1829 = vmatpush1.msra.mxu0 %v1828
    %v1830 = vand.u32 %v1415, 4294901760
    %v1831 = vsub.f32 %v1415, %v1830
    %1832 = vmatprep.subr.mxu0 %v1831
    %v1833 = vand.u32 %v1414, 4294901760
    %v1834 = vsub.f32 %v1414, %v1833
    %1835 = vmatpush1.msra.mxu0 %v1834
    %v1836 = vand.u32 %v1417, 4294901760
    %v1837 = vsub.f32 %v1417, %v1836
    %1838 = vmatprep.subr.mxu0 %v1837
    %v1839 = vand.u32 %v1416, 4294901760
    %v1840 = vsub.f32 %v1416, %v1839
    %1841 = vmatpush1.msra.mxu0 %v1840
    %v1842 = vand.u32 %v1419, 4294901760
    %v1843 = vsub.f32 %v1419, %v1842
    %1844 = vmatprep.subr.mxu0 %v1843
    %v1845 = vand.u32 %v1418, 4294901760
    %v1846 = vsub.f32 %v1418, %v1845
    %1847 = vmatpush1.msra.mxu0 %v1846
    %v1848 = vand.u32 %v1421, 4294901760
    %v1849 = vsub.f32 %v1421, %v1848
    %1850 = vmatprep.subr.mxu0 %v1849
    %v1851 = vand.u32 %v1420, 4294901760
    %v1852 = vsub.f32 %v1420, %v1851
    %1853 = vmatpush1.msra.mxu0 %v1852
    %v1854 = vand.u32 %v1423, 4294901760
    %v1855 = vsub.f32 %v1423, %v1854
    %1856 = vmatprep.subr.mxu0 %v1855
    %v1857 = vand.u32 %v1422, 4294901760
    %v1858 = vsub.f32 %v1422, %v1857
    %1859 = vmatpush1.msra.mxu0 %v1858
    %v1860 = vand.u32 %v1425, 4294901760
    %v1861 = vsub.f32 %v1425, %v1860
    %1862 = vmatprep.subr.mxu0 %v1861
    %v1863 = vand.u32 %v1424, 4294901760
    %v1864 = vsub.f32 %v1424, %v1863
    %1865 = vmatpush1.msra.mxu0 %v1864
    %v1866 = vand.u32 %v1427, 4294901760
    %v1867 = vsub.f32 %v1427, %v1866
    %1868 = vmatprep.subr.mxu0 %v1867
    %v1869 = vand.u32 %v1426, 4294901760
    %v1870 = vsub.f32 %v1426, %v1869
    %1871 = vmatpush1.msra.mxu0 %v1870
    %v1872 = vand.u32 %v1429, 4294901760
    %v1873 = vsub.f32 %v1429, %v1872
    %1874 = vmatprep.subr.mxu0 %v1873
    %v1875 = vand.u32 %v1428, 4294901760
    %v1876 = vsub.f32 %v1428, %v1875
    %1877 = vmatpush1.msra.mxu0 %v1876
    %1878 = vmatprep.subr.mxu0 0.0
    %1879 = vmatpush1.msra.mxu0 0.0
    %1880 = vmatprep.subr.mxu0 0.0
    %1881 = vmatpush1.msra.mxu0 0.0
    %1882 = vmatprep.subr.mxu0 0.0
    %1883 = vmatpush1.msra.mxu0 0.0
    %1884 = vmatprep.subr.mxu0 0.0
    %1885 = vmatpush1.msra.mxu0 0.0
    %1886 = vmatprep.subr.mxu0 0.0
    %1887 = vmatpush1.msra.mxu0 0.0
    %1888 = vmatprep.subr.mxu0 0.0
    %1889 = vmatpush1.msra.mxu0 0.0
    %1890 = vmatprep.subr.mxu0 0.0
    %1891 = vmatpush1.msra.mxu0 0.0
    %1892 = vmatprep.subr.mxu0 0.0
    %1893 = vmatpush1.msra.mxu0 0.0
    %1894 = vmatprep.subr.mxu0 0.0
    %1895 = vmatpush1.msra.mxu0 0.0
    %1896 = vmatprep.subr.mxu0 0.0
    %1897 = vmatpush1.msra.mxu0 0.0
    %1898 = vmatprep.subr.mxu0 0.0
    %1899 = vmatpush1.msra.mxu0 0.0
    %1900 = vmatprep.subr.mxu0 0.0
    %1901 = vmatpush1.msra.mxu0 0.0
    %1902 = vmatprep.subr.mxu0 0.0
    %1903 = vmatpush1.msra.mxu0 0.0
    %1904 = vmatprep.subr.mxu0 0.0
    %1905 = vmatpush1.msra.mxu0 0.0
    %1906 = vmatprep.subr.mxu0 0.0
    %1907 = vmatpush1.msra.mxu0 0.0
    %1908 = vmatprep.subr.mxu0 0.0
    %1909 = vmatpush1.msra.mxu0 0.0
    %1910 = vmatprep.mubr.f32.mxu0 0.0
    %v1911 = vand.u32 %v1397, 4294901760
    %v1912 = vsub.f32 %v1397, %v1911
    %1913 = vmatmul.mubr.f32.gmra.mrb[0].mxu0 %v1912
    %v1914 = vpop.f32.mrb[0].mxu0
    %v1915 = vadd.f32 %v1778, %v1914
    %v1916 = vpop.f32.mrb[0].mxu0
    %v1917 = vadd.f32 %v1780, %v1916
    %1918 = vdwg.mxu0
    %v1919 = vand.u32 %v1399, 4294901760
    %1920 = vmatprep.subr.mxu0 %v1919
    %v1921 = vand.u32 %v1398, 4294901760
    %1922 = vmatpush1.msra.mxu0 %v1921
    %v1923 = vand.u32 %v1401, 4294901760
    %1924 = vmatprep.subr.mxu0 %v1923
    %v1925 = vand.u32 %v1400, 4294901760
    %1926 = vmatpush1.msra.mxu0 %v1925
    %v1927 = vand.u32 %v1403, 4294901760
    %1928 = vmatprep.subr.mxu0 %v1927
    %v1929 = vand.u32 %v1402, 4294901760
    %1930 = vmatpush1.msra.mxu0 %v1929
    %v1931 = vand.u32 %v1405, 4294901760
    %1932 = vmatprep.subr.mxu0 %v1931
    %v1933 = vand.u32 %v1404, 4294901760
    %1934 = vmatpush1.msra.mxu0 %v1933
    %v1935 = vand.u32 %v1407, 4294901760
    %1936 = vmatprep.subr.mxu0 %v1935
    %v1937 = vand.u32 %v1406, 4294901760
    %1938 = vmatpush1.msra.mxu0 %v1937
    %v1939 = vand.u32 %v1409, 4294901760
    %1940 = vmatprep.subr.mxu0 %v1939
    %v1941 = vand.u32 %v1408, 4294901760
    %1942 = vmatpush1.msra.mxu0 %v1941
    %v1943 = vand.u32 %v1411, 4294901760
    %1944 = vmatprep.subr.mxu0 %v1943
    %v1945 = vand.u32 %v1410, 4294901760
    %1946 = vmatpush1.msra.mxu0 %v1945
    %v1947 = vand.u32 %v1413, 4294901760
    %1948 = vmatprep.subr.mxu0 %v1947
    %v1949 = vand.u32 %v1412, 4294901760
    %1950 = vmatpush1.msra.mxu0 %v1949
    %v1951 = vand.u32 %v1415, 4294901760
    %1952 = vmatprep.subr.mxu0 %v1951
    %v1953 = vand.u32 %v1414, 4294901760
    %1954 = vmatpush1.msra.mxu0 %v1953
    %v1955 = vand.u32 %v1417, 4294901760
    %1956 = vmatprep.subr.mxu0 %v1955
    %v1957 = vand.u32 %v1416, 4294901760
    %1958 = vmatpush1.msra.mxu0 %v1957
    %v1959 = vand.u32 %v1419, 4294901760
    %1960 = vmatprep.subr.mxu0 %v1959
    %v1961 = vand.u32 %v1418, 4294901760
    %1962 = vmatpush1.msra.mxu0 %v1961
    %v1963 = vand.u32 %v1421, 4294901760
    %1964 = vmatprep.subr.mxu0 %v1963
    %v1965 = vand.u32 %v1420, 4294901760
    %1966 = vmatpush1.msra.mxu0 %v1965
    %v1967 = vand.u32 %v1423, 4294901760
    %1968 = vmatprep.subr.mxu0 %v1967
    %v1969 = vand.u32 %v1422, 4294901760
    %1970 = vmatpush1.msra.mxu0 %v1969
    %v1971 = vand.u32 %v1425, 4294901760
    %1972 = vmatprep.subr.mxu0 %v1971
    %v1973 = vand.u32 %v1424, 4294901760
    %1974 = vmatpush1.msra.mxu0 %v1973
    %v1975 = vand.u32 %v1427, 4294901760
    %1976 = vmatprep.subr.mxu0 %v1975
    %v1977 = vand.u32 %v1426, 4294901760
    %1978 = vmatpush1.msra.mxu0 %v1977
    %v1979 = vand.u32 %v1429, 4294901760
    %1980 = vmatprep.subr.mxu0 %v1979
    %v1981 = vand.u32 %v1428, 4294901760
    %1982 = vmatpush1.msra.mxu0 %v1981
    %1983 = vmatprep.subr.mxu0 0.0
    %1984 = vmatpush1.msra.mxu0 0.0
    %1985 = vmatprep.subr.mxu0 0.0
    %1986 = vmatpush1.msra.mxu0 0.0
    %1987 = vmatprep.subr.mxu0 0.0
    %1988 = vmatpush1.msra.mxu0 0.0
    %1989 = vmatprep.subr.mxu0 0.0
    %1990 = vmatpush1.msra.mxu0 0.0
    %1991 = vmatprep.subr.mxu0 0.0
    %1992 = vmatpush1.msra.mxu0 0.0
    %1993 = vmatprep.subr.mxu0 0.0
    %1994 = vmatpush1.msra.mxu0 0.0
    %1995 = vmatprep.subr.mxu0 0.0
    %1996 = vmatpush1.msra.mxu0 0.0
    %1997 = vmatprep.subr.mxu0 0.0
    %1998 = vmatpush1.msra.mxu0 0.0
    %1999 = vmatprep.subr.mxu0 0.0
    %2000 = vmatpush1.msra.mxu0 0.0
    %2001 = vmatprep.subr.mxu0 0.0
    %2002 = vmatpush1.msra.mxu0 0.0
    %2003 = vmatprep.subr.mxu0 0.0
    %2004 = vmatpush1.msra.mxu0 0.0
    %2005 = vmatprep.subr.mxu0 0.0
    %2006 = vmatpush1.msra.mxu0 0.0
    %2007 = vmatprep.subr.mxu0 0.0
    %2008 = vmatpush1.msra.mxu0 0.0
    %2009 = vmatprep.subr.mxu0 0.0
    %2010 = vmatpush1.msra.mxu0 0.0
    %2011 = vmatprep.subr.mxu0 0.0
    %2012 = vmatpush1.msra.mxu0 0.0
    %2013 = vmatprep.subr.mxu0 0.0
    %2014 = vmatpush1.msra.mxu0 0.0
    %2015 = vmatprep.mubr.f32.mxu0 0.0
    %v2016 = vand.u32 %v1397, 4294901760
    %v2017 = vsub.f32 %v1397, %v2016
    %v2018 = vand.u32 %v2017, 4294901760
    %2019 = vmatmul.mubr.f32.gmra.mrb[0].mxu0 %v2018
    %v2020 = vpop.f32.mrb[0].mxu0
    %v2021 = vadd.f32 %v1915, %v2020
    %v2022 = vpop.f32.mrb[0].mxu0
    %v2023 = vadd.f32 %v1917, %v2022
    %2024 = vdwg.mxu0
    %v2025 = vand.u32 %v1399, 4294901760
    %v2026 = vsub.f32 %v1399, %v2025
    %v2027 = vand.u32 %v2026, 4294901760
    %2028 = vmatprep.subr.mxu0 %v2027
    %v2029 = vand.u32 %v1398, 4294901760
    %v2030 = vsub.f32 %v1398, %v2029
    %v2031 = vand.u32 %v2030, 4294901760
    %2032 = vmatpush1.msra.mxu0 %v2031
    %v2033 = vand.u32 %v1401, 4294901760
    %v2034 = vsub.f32 %v1401, %v2033
    %v2035 = vand.u32 %v2034, 4294901760
    %2036 = vmatprep.subr.mxu0 %v2035
    %v2037 = vand.u32 %v1400, 4294901760
    %v2038 = vsub.f32 %v1400, %v2037
    %v2039 = vand.u32 %v2038, 4294901760
    %2040 = vmatpush1.msra.mxu0 %v2039
    %v2041 = vand.u32 %v1403, 4294901760
    %v2042 = vsub.f32 %v1403, %v2041
    %v2043 = vand.u32 %v2042, 4294901760
    %2044 = vmatprep.subr.mxu0 %v2043
    %v2045 = vand.u32 %v1402, 4294901760
    %v2046 = vsub.f32 %v1402, %v2045
    %v2047 = vand.u32 %v2046, 4294901760
    %2048 = vmatpush1.msra.mxu0 %v2047
    %v2049 = vand.u32 %v1405, 4294901760
    %v2050 = vsub.f32 %v1405, %v2049
    %v2051 = vand.u32 %v2050, 4294901760
    %2052 = vmatprep.subr.mxu0 %v2051
    %v2053 = vand.u32 %v1404, 4294901760
    %v2054 = vsub.f32 %v1404, %v2053
    %v2055 = vand.u32 %v2054, 4294901760
    %2056 = vmatpush1.msra.mxu0 %v2055
    %v2057 = vand.u32 %v1407, 4294901760
    %v2058 = vsub.f32 %v1407, %v2057
    %v2059 = vand.u32 %v2058, 4294901760
    %2060 = vmatprep.subr.mxu0 %v2059
    %v2061 = vand.u32 %v1406, 4294901760
    %v2062 = vsub.f32 %v1406, %v2061
    %v2063 = vand.u32 %v2062, 4294901760
    %2064 = vmatpush1.msra.mxu0 %v2063
    %v2065 = vand.u32 %v1409, 4294901760
    %v2066 = vsub.f32 %v1409, %v2065
    %v2067 = vand.u32 %v2066, 4294901760
    %2068 = vmatprep.subr.mxu0 %v2067
    %v2069 = vand.u32 %v1408, 4294901760
    %v2070 = vsub.f32 %v1408, %v2069
    %v2071 = vand.u32 %v2070, 4294901760
    %2072 = vmatpush1.msra.mxu0 %v2071
    %v2073 = vand.u32 %v1411, 4294901760
    %v2074 = vsub.f32 %v1411, %v2073
    %v2075 = vand.u32 %v2074, 4294901760
    %2076 = vmatprep.subr.mxu0 %v2075
    %v2077 = vand.u32 %v1410, 4294901760
    %v2078 = vsub.f32 %v1410, %v2077
    %v2079 = vand.u32 %v2078, 4294901760
    %2080 = vmatpush1.msra.mxu0 %v2079
    %v2081 = vand.u32 %v1413, 4294901760
    %v2082 = vsub.f32 %v1413, %v2081
    %v2083 = vand.u32 %v2082, 4294901760
    %2084 = vmatprep.subr.mxu0 %v2083
    %v2085 = vand.u32 %v1412, 4294901760
    %v2086 = vsub.f32 %v1412, %v2085
    %v2087 = vand.u32 %v2086, 4294901760
    %2088 = vmatpush1.msra.mxu0 %v2087
    %v2089 = vand.u32 %v1415, 4294901760
    %v2090 = vsub.f32 %v1415, %v2089
    %v2091 = vand.u32 %v2090, 4294901760
    %2092 = vmatprep.subr.mxu0 %v2091
    %v2093 = vand.u32 %v1414, 4294901760
    %v2094 = vsub.f32 %v1414, %v2093
    %v2095 = vand.u32 %v2094, 4294901760
    %2096 = vmatpush1.msra.mxu0 %v2095
    %v2097 = vand.u32 %v1417, 4294901760
    %v2098 = vsub.f32 %v1417, %v2097
    %v2099 = vand.u32 %v2098, 4294901760
    %2100 = vmatprep.subr.mxu0 %v2099
    %v2101 = vand.u32 %v1416, 4294901760
    %v2102 = vsub.f32 %v1416, %v2101
    %v2103 = vand.u32 %v2102, 4294901760
    %2104 = vmatpush1.msra.mxu0 %v2103
    %v2105 = vand.u32 %v1419, 4294901760
    %v2106 = vsub.f32 %v1419, %v2105
    %v2107 = vand.u32 %v2106, 4294901760
    %2108 = vmatprep.subr.mxu0 %v2107
    %v2109 = vand.u32 %v1418, 4294901760
    %v2110 = vsub.f32 %v1418, %v2109
    %v2111 = vand.u32 %v2110, 4294901760
    %2112 = vmatpush1.msra.mxu0 %v2111
    %v2113 = vand.u32 %v1421, 4294901760
    %v2114 = vsub.f32 %v1421, %v2113
    %v2115 = vand.u32 %v2114, 4294901760
    %2116 = vmatprep.subr.mxu0 %v2115
    %v2117 = vand.u32 %v1420, 4294901760
    %v2118 = vsub.f32 %v1420, %v2117
    %v2119 = vand.u32 %v2118, 4294901760
    %2120 = vmatpush1.msra.mxu0 %v2119
    %v2121 = vand.u32 %v1423, 4294901760
    %v2122 = vsub.f32 %v1423, %v2121
    %v2123 = vand.u32 %v2122, 4294901760
    %2124 = vmatprep.subr.mxu0 %v2123
    %v2125 = vand.u32 %v1422, 4294901760
    %v2126 = vsub.f32 %v1422, %v2125
    %v2127 = vand.u32 %v2126, 4294901760
    %2128 = vmatpush1.msra.mxu0 %v2127
    %v2129 = vand.u32 %v1425, 4294901760
    %v2130 = vsub.f32 %v1425, %v2129
    %v2131 = vand.u32 %v2130, 4294901760
    %2132 = vmatprep.subr.mxu0 %v2131
    %v2133 = vand.u32 %v1424, 4294901760
    %v2134 = vsub.f32 %v1424, %v2133
    %v2135 = vand.u32 %v2134, 4294901760
    %2136 = vmatpush1.msra.mxu0 %v2135
    %v2137 = vand.u32 %v1427, 4294901760
    %v2138 = vsub.f32 %v1427, %v2137
    %v2139 = vand.u32 %v2138, 4294901760
    %2140 = vmatprep.subr.mxu0 %v2139
    %v2141 = vand.u32 %v1426, 4294901760
    %v2142 = vsub.f32 %v1426, %v2141
    %v2143 = vand.u32 %v2142, 4294901760
    %2144 = vmatpush1.msra.mxu0 %v2143
    %v2145 = vand.u32 %v1429, 4294901760
    %v2146 = vsub.f32 %v1429, %v2145
    %v2147 = vand.u32 %v2146, 4294901760
    %2148 = vmatprep.subr.mxu0 %v2147
    %v2149 = vand.u32 %v1428, 4294901760
    %v2150 = vsub.f32 %v1428, %v2149
    %v2151 = vand.u32 %v2150, 4294901760
    %2152 = vmatpush1.msra.mxu0 %v2151
    %2153 = vmatprep.subr.mxu0 0.0
    %2154 = vmatpush1.msra.mxu0 0.0
    %2155 = vmatprep.subr.mxu0 0.0
    %2156 = vmatpush1.msra.mxu0 0.0
    %2157 = vmatprep.subr.mxu0 0.0
    %2158 = vmatpush1.msra.mxu0 0.0
    %2159 = vmatprep.subr.mxu0 0.0
    %2160 = vmatpush1.msra.mxu0 0.0
    %2161 = vmatprep.subr.mxu0 0.0
    %2162 = vmatpush1.msra.mxu0 0.0
    %2163 = vmatprep.subr.mxu0 0.0
    %2164 = vmatpush1.msra.mxu0 0.0
    %2165 = vmatprep.subr.mxu0 0.0
    %2166 = vmatpush1.msra.mxu0 0.0
    %2167 = vmatprep.subr.mxu0 0.0
    %2168 = vmatpush1.msra.mxu0 0.0
    %2169 = vmatprep.subr.mxu0 0.0
    %2170 = vmatpush1.msra.mxu0 0.0
    %2171 = vmatprep.subr.mxu0 0.0
    %2172 = vmatpush1.msra.mxu0 0.0
    %2173 = vmatprep.subr.mxu0 0.0
    %2174 = vmatpush1.msra.mxu0 0.0
    %2175 = vmatprep.subr.mxu0 0.0
    %2176 = vmatpush1.msra.mxu0 0.0
    %2177 = vmatprep.subr.mxu0 0.0
    %2178 = vmatpush1.msra.mxu0 0.0
    %2179 = vmatprep.subr.mxu0 0.0
    %2180 = vmatpush1.msra.mxu0 0.0
    %2181 = vmatprep.subr.mxu0 0.0
    %2182 = vmatpush1.msra.mxu0 0.0
    %2183 = vmatprep.subr.mxu0 0.0
    %2184 = vmatpush1.msra.mxu0 0.0
    %2185 = vmatprep.mubr.f32.mxu0 0.0
    %v2186 = vand.u32 %v1397, 4294901760
    %2187 = vmatmul.mubr.f32.gmra.mrb[0].mxu0 %v2186
    %v2188 = vpop.f32.mrb[0].mxu0
    %v2189 = vadd.f32 %v2021, %v2188
    %v2190 = vpop.f32.mrb[0].mxu0
    %v2191 = vadd.f32 %v2023, %v2190
    %2192 = vdwg.mxu0
    %v2193 = vand.u32 %v1399, 4294901760
    %2194 = vmatprep.subr.mxu0 %v2193
    %v2195 = vand.u32 %v1398, 4294901760
    %2196 = vmatpush1.msra.mxu0 %v2195
    %v2197 = vand.u32 %v1401, 4294901760
    %2198 = vmatprep.subr.mxu0 %v2197
    %v2199 = vand.u32 %v1400, 4294901760
    %2200 = vmatpush1.msra.mxu0 %v2199
    %v2201 = vand.u32 %v1403, 4294901760
    %2202 = vmatprep.subr.mxu0 %v2201
    %v2203 = vand.u32 %v1402, 4294901760
    %2204 = vmatpush1.msra.mxu0 %v2203
    %v2205 = vand.u32 %v1405, 4294901760
    %2206 = vmatprep.subr.mxu0 %v2205
    %v2207 = vand.u32 %v1404, 4294901760
    %2208 = vmatpush1.msra.mxu0 %v2207
    %v2209 = vand.u32 %v1407, 4294901760
    %2210 = vmatprep.subr.mxu0 %v2209
    %v2211 = vand.u32 %v1406, 4294901760
    %2212 = vmatpush1.msra.mxu0 %v2211
    %v2213 = vand.u32 %v1409, 4294901760
    %2214 = vmatprep.subr.mxu0 %v2213
    %v2215 = vand.u32 %v1408, 4294901760
    %2216 = vmatpush1.msra.mxu0 %v2215
    %v2217 = vand.u32 %v1411, 4294901760
    %2218 = vmatprep.subr.mxu0 %v2217
    %v2219 = vand.u32 %v1410, 4294901760
    %2220 = vmatpush1.msra.mxu0 %v2219
    %v2221 = vand.u32 %v1413, 4294901760
    %2222 = vmatprep.subr.mxu0 %v2221
    %v2223 = vand.u32 %v1412, 4294901760
    %2224 = vmatpush1.msra.mxu0 %v2223
    %v2225 = vand.u32 %v1415, 4294901760
    %2226 = vmatprep.subr.mxu0 %v2225
    %v2227 = vand.u32 %v1414, 4294901760
    %2228 = vmatpush1.msra.mxu0 %v2227
    %v2229 = vand.u32 %v1417, 4294901760
    %2230 = vmatprep.subr.mxu0 %v2229
    %v2231 = vand.u32 %v1416, 4294901760
    %2232 = vmatpush1.msra.mxu0 %v2231
    %v2233 = vand.u32 %v1419, 4294901760
    %2234 = vmatprep.subr.mxu0 %v2233
    %v2235 = vand.u32 %v1418, 4294901760
    %2236 = vmatpush1.msra.mxu0 %v2235
    %v2237 = vand.u32 %v1421, 4294901760
    %2238 = vmatprep.subr.mxu0 %v2237
    %v2239 = vand.u32 %v1420, 4294901760
    %2240 = vmatpush1.msra.mxu0 %v2239
    %v2241 = vand.u32 %v1423, 4294901760
    %2242 = vmatprep.subr.mxu0 %v2241
    %v2243 = vand.u32 %v1422, 4294901760
    %2244 = vmatpush1.msra.mxu0 %v2243
    %v2245 = vand.u32 %v1425, 4294901760
    %2246 = vmatprep.subr.mxu0 %v2245
    %v2247 = vand.u32 %v1424, 4294901760
    %2248 = vmatpush1.msra.mxu0 %v2247
    %v2249 = vand.u32 %v1427, 4294901760
    %2250 = vmatprep.subr.mxu0 %v2249
    %v2251 = vand.u32 %v1426, 4294901760
    %2252 = vmatpush1.msra.mxu0 %v2251
    %v2253 = vand.u32 %v1429, 4294901760
    %2254 = vmatprep.subr.mxu0 %v2253
    %v2255 = vand.u32 %v1428, 4294901760
    %2256 = vmatpush1.msra.mxu0 %v2255
    %2257 = vmatprep.subr.mxu0 0.0
    %2258 = vmatpush1.msra.mxu0 0.0
    %2259 = vmatprep.subr.mxu0 0.0
    %2260 = vmatpush1.msra.mxu0 0.0
    %2261 = vmatprep.subr.mxu0 0.0
    %2262 = vmatpush1.msra.mxu0 0.0
    %2263 = vmatprep.subr.mxu0 0.0
    %2264 = vmatpush1.msra.mxu0 0.0
    %2265 = vmatprep.subr.mxu0 0.0
    %2266 = vmatpush1.msra.mxu0 0.0
    %2267 = vmatprep.subr.mxu0 0.0
    %2268 = vmatpush1.msra.mxu0 0.0
    %2269 = vmatprep.subr.mxu0 0.0
    %2270 = vmatpush1.msra.mxu0 0.0
    %2271 = vmatprep.subr.mxu0 0.0
    %2272 = vmatpush1.msra.mxu0 0.0
    %2273 = vmatprep.subr.mxu0 0.0
    %2274 = vmatpush1.msra.mxu0 0.0
    %2275 = vmatprep.subr.mxu0 0.0
    %2276 = vmatpush1.msra.mxu0 0.0
    %2277 = vmatprep.subr.mxu0 0.0
    %2278 = vmatpush1.msra.mxu0 0.0
    %2279 = vmatprep.subr.mxu0 0.0
    %2280 = vmatpush1.msra.mxu0 0.0
    %2281 = vmatprep.subr.mxu0 0.0
    %2282 = vmatpush1.msra.mxu0 0.0
    %2283 = vmatprep.subr.mxu0 0.0
    %2284 = vmatpush1.msra.mxu0 0.0
    %2285 = vmatprep.subr.mxu0 0.0
    %2286 = vmatpush1.msra.mxu0 0.0
    %2287 = vmatprep.subr.mxu0 0.0
    %2288 = vmatpush1.msra.mxu0 0.0
    %2289 = vmatprep.mubr.f32.mxu0 0.0
    %v2290 = vand.u32 %v1397, 4294901760
    %2291 = vmatmul.mubr.f32.gmra.mrb[0].mxu0 %v2290
    %v2292 = vpop.f32.mrb[0].mxu0
    %v2293 = vadd.f32 %v2189, %v2292
    %v2294 = vpop.f32.mrb[0].mxu0
    %v2295 = vadd.f32 %v2191, %v2294
    %2296 = vdwg.mxu0
    %v2297 = vmul.f32 %v2295, 0.5
    %v2298 = vmul.f32 %v2297, 1.442695
    %v2299 = vpow.pop %v2298
    %2300 = vst [vmem:[%s7] sm:$0xff] %v2293
    %2301 = vst [vmem:[%s7 + $0x8] sm:$0xff] %v2295
    %2302 = vst [vmem:[%s7 + $0x10] sm:$0xff] %v2299
    // Predicated region
    $region42: #{_forward.1} parent=1 // pred_check
      _
    $region43: #{_forward.1} parent=1 // pred_check_branch
      %2304 = sbr.rel (0) target = $region45
    $region44: #{_forward.1} parent=1 // pred_region
      _
    $region45: #{_forward.1} parent=1 // pred_fallthru
      _
    // Predicated region
    $region46: #{_forward.1} parent=1 // pred_check
      _
    $region47: #{_forward.1} parent=1 // pred_check_branch
      %2306 = sbr.rel (0) target = $region49
    $region48: #{_forward.1} parent=1 // pred_region
      _
    $region49: #{_forward.1} parent=1 // pred_fallthru
      _
    %2307 = vsyncpa [#allocation3], 1
    %2308 = vsyncpa [#allocation5], 1

</llo_original>
